<compile_context>
chip_gen: v7x
topology: tpu7x:2x2x1
jax: 0.10.0
libtpu: 0.0.40
codegen_flags: <defaults>
</compile_context>

<pallas_src>
import jax
import jax.numpy as jnp
from jax.experimental import pallas as pl
from jax.experimental.pallas import tpu as pltpu


def _round_up(x, m):
    return (x + m - 1) // m * m


# -----------------------------------------------------------------------------
# Pallas kernel: one batch-tile of the whole auxiliary classifier.
# -----------------------------------------------------------------------------
def _make_kernel(n_groups):
    def kernel(*refs):
        x_refs = refs[:n_groups]                    # each (TN, HW, Cg) bf16
        w_refs = refs[n_groups:2 * n_groups]        # each (Cg, Ncls_pad) f32 (folded)
        b_ref = refs[2 * n_groups]                  # (1, Ncls_pad) f32
        out_ref = refs[2 * n_groups + 1]            # (TN, Ncls_pad) f32

        acc = None
        for x_ref, w_ref in zip(x_refs, w_refs):
            # Global avg-pool commutes with the bias-free stride-1 1x1 conv;
            # the 1/HW and conv/fc weights are pre-folded into w_ref, so here
            # we just sum over HW (f32 accumulation from the bf16 stream,
            # channels stay on lanes) and do one small MXU matmul per group.
            pooled = jnp.sum(x_ref[...].astype(jnp.float32), axis=1)      # (TN, Cg)
            part = jnp.dot(pooled, w_ref[...],
                           preferred_element_type=jnp.float32)            # (TN, Ncls_pad)
            acc = part if acc is None else acc + part
        out_ref[...] = acc + b_ref[...]
    return kernel


# -----------------------------------------------------------------------------
# Wrapper: weight folding + layout plumbing + gridded pallas_call.
# -----------------------------------------------------------------------------
def aux_classifier_pallas(xs, params, *, tn=8):
    # xs: list of NCHW feature maps (the torch.cat(x, dim=1) operands)
    n_groups = len(xs)
    N = xs[0].shape[0]
    H, W = xs[0].shape[2], xs[0].shape[3]
    HW = H * W
    c_groups = [int(x.shape[1]) for x in xs]
    Cin = sum(c_groups)

    w_conv = params["w_conv"]        # (Cmid, Cin, 1, 1)  conv1x1, bias=False
    w_fc = params["w_fc"]            # (Ncls, Cmid)       nn.Linear weight
    b_fc = params["b_fc"]            # (Ncls,)            nn.Linear bias
    Cmid = w_conv.shape[0]
    Ncls = w_fc.shape[0]
    Ncls_pad = _round_up(Ncls, 128)  # lane-dense output slab

    # ---- weight folding (exact: pool/conv/fc are all linear-affine) ----------
    #   out = mean_hw(x) @ Wc^T @ Wf^T + b == sum_hw(x) @ [(1/HW) Wc^T Wf^T] + b
    # In practice fold once at init; done per-call here for self-containment.
    wc_t = jnp.transpose(w_conv.reshape(Cmid, Cin)).astype(jnp.float32)       # (Cin, Cmid)
    wf_t = jnp.zeros((Cmid, Ncls_pad), jnp.float32).at[:, :Ncls].set(
        jnp.transpose(w_fc).astype(jnp.float32))
    w_fold = jnp.dot(wc_t, wf_t,
                     precision=jax.lax.Precision.HIGHEST) * (1.0 / float(HW))  # (Cin, Ncls_pad)
    b_pad = jnp.zeros((1, Ncls_pad), jnp.float32).at[0, :Ncls].set(
        b_fc.astype(jnp.float32))

    offs = [0]
    for c in c_groups:
        offs.append(offs[-1] + c)
    w_groups = [w_fold[offs[g]:offs[g + 1], :] for g in range(n_groups)]

    # ---- activation streams: per feature map (no concat), channels-last bf16 --
    # TODO(synk): the NCHW->NHWC transpose + f32->bf16 cast is still one full HBM
    # pass done by XLA; emitting channels-last bf16 from the producing layer (or
    # fusing this pooling into it) would remove it.
    tn = max(1, min(tn, N))
    N_pad = _round_up(N, tn)
    x_streams = []
    for x, c in zip(xs, c_groups):
        x_nlc = jnp.transpose(x.astype(jnp.bfloat16), (0, 2, 3, 1)).reshape(N, HW, c)
        if N_pad != N:
            x_nlc = jnp.pad(x_nlc, ((0, N_pad - N), (0, 0), (0, 0)))
        x_streams.append(x_nlc)

    grid = (N_pad // tn,)
    in_specs = (
        # x: streamed per batch-tile (double-buffered by the pipeline)
        [pl.BlockSpec((tn, HW, c), lambda n: (n, 0, 0)) for c in c_groups]
        # folded weights / bias: constant index_map -> DMA'd once, stay resident
        + [pl.BlockSpec((c, Ncls_pad), lambda n: (0, 0)) for c in c_groups]
        + [pl.BlockSpec((1, Ncls_pad), lambda n: (0, 0))]
    )
    out_spec = pl.BlockSpec((tn, Ncls_pad), lambda n: (n, 0))

    out = pl.pallas_call(
        _make_kernel(n_groups),
        out_shape=jax.ShapeDtypeStruct((N_pad, Ncls_pad), jnp.float32),
        grid=grid,
        in_specs=in_specs,
        out_specs=out_spec,
        compiler_params=pltpu.CompilerParams(
            dimension_semantics=("parallel",)),  # both TCs split the batch on v7x
    )(*x_streams, *w_groups, b_pad)

    return out[:N, :Ncls]


# -----------------------------------------------------------------------------
# Pure-JAX reference (literal PyTorch op order: cat -> conv1x1 -> pool -> fc).
# -----------------------------------------------------------------------------
def reference_forward(xs, params):
    x = jnp.concatenate(xs, axis=1)
    out = jax.lax.conv_general_dilated(
        x, params["w_conv"], (1, 1), "VALID",
        dimension_numbers=("NCHW", "OIHW", "NCHW"),
        precision=jax.lax.Precision.HIGHEST)
    out = jnp.mean(out, axis=(2, 3))                                  # (N, Cmid)
    out = jnp.dot(out, jnp.transpose(params["w_fc"]),
                  precision=jax.lax.Precision.HIGHEST) + params["b_fc"]
    return out


if __name__ == "__main__":
    key = jax.random.PRNGKey(0)
    k_feats, k_conv, k_fc_w, k_fc_b = jax.random.split(key, 4)

    # Scaled-down stand-in for the real dims (512*block.expansion -> 128).
    N, C_block, H, W = 16, 128, 8, 8
    num_classes = 100
    C_in = 4 * C_block                       # torch.cat of 4 feature maps

    fkeys = jax.random.split(k_feats, 4)
    xs = [jax.random.normal(fk, (N, C_block, H, W), jnp.float32) for fk in fkeys]

    params = {
        "w_conv": 0.05 * jax.random.normal(k_conv, (C_block, C_in, 1, 1), jnp.float32),
        "w_fc":   0.05 * jax.random.normal(k_fc_w, (num_classes, C_block), jnp.float32),
        "b_fc":   0.05 * jax.random.normal(k_fc_b, (num_classes,), jnp.float32),
    }

    out = aux_classifier_pallas(xs, params, tn=8)
    out = jax.block_until_ready(out)

    ref = reference_forward(xs, params)
    err = float(jnp.max(jnp.abs(out - ref)))
    assert out.shape == (N, num_classes), f"bad output shape {out.shape}"
    # bf16 activation stream -> small quantization error vs. the f32 reference.
    assert err < 3e-3, f"kernel/reference mismatch: max abs err = {err}"

    print("KERNEL_OK")
</pallas_src>

<mosaic_0001>
module attributes {stable_mosaic.version = 11 : i64} {
  func.func @kernel(%arg0: i32, %arg1: memref<8x64x128xbf16, #tpu.memory_space<vmem>>, %arg2: memref<8x64x128xbf16, #tpu.memory_space<vmem>>, %arg3: memref<8x64x128xbf16, #tpu.memory_space<vmem>>, %arg4: memref<8x64x128xbf16, #tpu.memory_space<vmem>>, %arg5: memref<128x128xf32, #tpu.memory_space<vmem>>, %arg6: memref<128x128xf32, #tpu.memory_space<vmem>>, %arg7: memref<128x128xf32, #tpu.memory_space<vmem>>, %arg8: memref<128x128xf32, #tpu.memory_space<vmem>>, %arg9: memref<1x128xf32, #tpu.memory_space<vmem>>, %arg10: memref<8x128xf32, #tpu.memory_space<vmem>>) attributes {dimension_semantics = [#tpu.dimension_semantics<parallel>], iteration_bounds = array<i64: 2>, scalar_prefetch = 0 : i64, scratch_operands = 0 : i64, tpu.core_type = #tpu.core_type<tc>, window_params = [{transform_indices = @transform_0, window_bounds = array<i64: 8, 64, 128>}, {transform_indices = @transform_1, window_bounds = array<i64: 8, 64, 128>}, {transform_indices = @transform_2, window_bounds = array<i64: 8, 64, 128>}, {transform_indices = @transform_3, window_bounds = array<i64: 8, 64, 128>}, {pipeline_mode = #tpu.pipeline_mode<synchronous>, transform_indices = @transform_4, window_bounds = array<i64: 128, 128>}, {pipeline_mode = #tpu.pipeline_mode<synchronous>, transform_indices = @transform_5, window_bounds = array<i64: 128, 128>}, {pipeline_mode = #tpu.pipeline_mode<synchronous>, transform_indices = @transform_6, window_bounds = array<i64: 128, 128>}, {pipeline_mode = #tpu.pipeline_mode<synchronous>, transform_indices = @transform_7, window_bounds = array<i64: 128, 128>}, {pipeline_mode = #tpu.pipeline_mode<synchronous>, transform_indices = @transform_8, window_bounds = array<i64: 1, 128>}, {transform_indices = @transform_9, window_bounds = array<i64: 8, 128>}]} {
    %c0 = arith.constant 0 : index
    %c0_0 = arith.constant 0 : index
    %c0_1 = arith.constant 0 : index
    %0 = vector.load %arg1[%c0, %c0_0, %c0_1] : memref<8x64x128xbf16, #tpu.memory_space<vmem>>, vector<8x64x128xbf16>
    %1 = arith.extf %0 : vector<8x64x128xbf16> to vector<8x64x128xf32>
    %cst = arith.constant dense<0.000000e+00> : vector<8x128xf32>
    %2 = vector.multi_reduction <add>, %1, %cst [1] : vector<8x64x128xf32> to vector<8x128xf32>
    %c0_2 = arith.constant 0 : index
    %c0_3 = arith.constant 0 : index
    %3 = vector.load %arg5[%c0_2, %c0_3] : memref<128x128xf32, #tpu.memory_space<vmem>>, vector<128x128xf32>
    %cst_4 = arith.constant dense<0.000000e+00> : vector<8x128xf32>
    %4 = tpu.matmul %2, %3, %cst_4 {dimension_numbers = #tpu.dot_dimension_numbers<[1], [0], [0], [1], [0, 0, 1, 1], [], []>} : vector<8x128xf32>, vector<128x128xf32>, vector<8x128xf32> -> vector<8x128xf32>
    %c0_5 = arith.constant 0 : index
    %c0_6 = arith.constant 0 : index
    %c0_7 = arith.constant 0 : index
    %5 = vector.load %arg2[%c0_5, %c0_6, %c0_7] : memref<8x64x128xbf16, #tpu.memory_space<vmem>>, vector<8x64x128xbf16>
    %6 = arith.extf %5 : vector<8x64x128xbf16> to vector<8x64x128xf32>
    %cst_8 = arith.constant dense<0.000000e+00> : vector<8x128xf32>
    %7 = vector.multi_reduction <add>, %6, %cst_8 [1] : vector<8x64x128xf32> to vector<8x128xf32>
    %c0_9 = arith.constant 0 : index
    %c0_10 = arith.constant 0 : index
    %8 = vector.load %arg6[%c0_9, %c0_10] : memref<128x128xf32, #tpu.memory_space<vmem>>, vector<128x128xf32>
    %cst_11 = arith.constant dense<0.000000e+00> : vector<8x128xf32>
    %9 = tpu.matmul %7, %8, %cst_11 {dimension_numbers = #tpu.dot_dimension_numbers<[1], [0], [0], [1], [0, 0, 1, 1], [], []>} : vector<8x128xf32>, vector<128x128xf32>, vector<8x128xf32> -> vector<8x128xf32>
    %10 = arith.addf %4, %9 : vector<8x128xf32>
    %c0_12 = arith.constant 0 : index
    %c0_13 = arith.constant 0 : index
    %c0_14 = arith.constant 0 : index
    %11 = vector.load %arg3[%c0_12, %c0_13, %c0_14] : memref<8x64x128xbf16, #tpu.memory_space<vmem>>, vector<8x64x128xbf16>
    %12 = arith.extf %11 : vector<8x64x128xbf16> to vector<8x64x128xf32>
    %cst_15 = arith.constant dense<0.000000e+00> : vector<8x128xf32>
    %13 = vector.multi_reduction <add>, %12, %cst_15 [1] : vector<8x64x128xf32> to vector<8x128xf32>
    %c0_16 = arith.constant 0 : index
    %c0_17 = arith.constant 0 : index
    %14 = vector.load %arg7[%c0_16, %c0_17] : memref<128x128xf32, #tpu.memory_space<vmem>>, vector<128x128xf32>
    %cst_18 = arith.constant dense<0.000000e+00> : vector<8x128xf32>
    %15 = tpu.matmul %13, %14, %cst_18 {dimension_numbers = #tpu.dot_dimension_numbers<[1], [0], [0], [1], [0, 0, 1, 1], [], []>} : vector<8x128xf32>, vector<128x128xf32>, vector<8x128xf32> -> vector<8x128xf32>
    %16 = arith.addf %10, %15 : vector<8x128xf32>
    %c0_19 = arith.constant 0 : index
    %c0_20 = arith.constant 0 : index
    %c0_21 = arith.constant 0 : index
    %17 = vector.load %arg4[%c0_19, %c0_20, %c0_21] : memref<8x64x128xbf16, #tpu.memory_space<vmem>>, vector<8x64x128xbf16>
    %18 = arith.extf %17 : vector<8x64x128xbf16> to vector<8x64x128xf32>
    %cst_22 = arith.constant dense<0.000000e+00> : vector<8x128xf32>
    %19 = vector.multi_reduction <add>, %18, %cst_22 [1] : vector<8x64x128xf32> to vector<8x128xf32>
    %c0_23 = arith.constant 0 : index
    %c0_24 = arith.constant 0 : index
    %20 = vector.load %arg8[%c0_23, %c0_24] : memref<128x128xf32, #tpu.memory_space<vmem>>, vector<128x128xf32>
    %cst_25 = arith.constant dense<0.000000e+00> : vector<8x128xf32>
    %21 = tpu.matmul %19, %20, %cst_25 {dimension_numbers = #tpu.dot_dimension_numbers<[1], [0], [0], [1], [0, 0, 1, 1], [], []>} : vector<8x128xf32>, vector<128x128xf32>, vector<8x128xf32> -> vector<8x128xf32>
    %22 = arith.addf %16, %21 : vector<8x128xf32>
    %c0_26 = arith.constant 0 : index
    %c0_27 = arith.constant 0 : index
    %23 = vector.load %arg9[%c0_26, %c0_27] : memref<1x128xf32, #tpu.memory_space<vmem>>, vector<1x128xf32>
    %24 = vector.broadcast %23 : vector<1x128xf32> to vector<8x128xf32>
    %25 = arith.addf %22, %24 : vector<8x128xf32>
    %c0_28 = arith.constant 0 : index
    %c0_29 = arith.constant 0 : index
    %26 = vector.load %arg10[%c0_28, %c0_29] : memref<8x128xf32, #tpu.memory_space<vmem>>, vector<8x128xf32>
    tpu.vector_store %arg10[%c0_28, %c0_29], %25 {strides = array<i32>} : memref<8x128xf32, #tpu.memory_space<vmem>>, vector<8x128xf32>,
    return
  }
  func.func @transform_0(%arg0: i32) -> (i32, i32, i32) {
    %c0_i32 = arith.constant 0 : i32
    %c0_i32_0 = arith.constant 0 : i32
    %c0_i32_1 = arith.constant 0 : i32
    return %arg0, %c0_i32, %c0_i32_0 : i32, i32, i32
  }
  func.func @transform_1(%arg0: i32) -> (i32, i32, i32) {
    %c0_i32 = arith.constant 0 : i32
    %c0_i32_0 = arith.constant 0 : i32
    %c0_i32_1 = arith.constant 0 : i32
    return %arg0, %c0_i32, %c0_i32_0 : i32, i32, i32
  }
  func.func @transform_2(%arg0: i32) -> (i32, i32, i32) {
    %c0_i32 = arith.constant 0 : i32
    %c0_i32_0 = arith.constant 0 : i32
    %c0_i32_1 = arith.constant 0 : i32
    return %arg0, %c0_i32, %c0_i32_0 : i32, i32, i32
  }
  func.func @transform_3(%arg0: i32) -> (i32, i32, i32) {
    %c0_i32 = arith.constant 0 : i32
    %c0_i32_0 = arith.constant 0 : i32
    %c0_i32_1 = arith.constant 0 : i32
    return %arg0, %c0_i32, %c0_i32_0 : i32, i32, i32
  }
  func.func @transform_4(%arg0: i32) -> (i32, i32) {
    %c0_i32 = arith.constant 0 : i32
    %c0_i32_0 = arith.constant 0 : i32
    %c0_i32_1 = arith.constant 0 : i32
    return %c0_i32, %c0_i32_0 : i32, i32
  }
  func.func @transform_5(%arg0: i32) -> (i32, i32) {
    %c0_i32 = arith.constant 0 : i32
    %c0_i32_0 = arith.constant 0 : i32
    %c0_i32_1 = arith.constant 0 : i32
    return %c0_i32, %c0_i32_0 : i32, i32
  }
  func.func @transform_6(%arg0: i32) -> (i32, i32) {
    %c0_i32 = arith.constant 0 : i32
    %c0_i32_0 = arith.constant 0 : i32
    %c0_i32_1 = arith.constant 0 : i32
    return %c0_i32, %c0_i32_0 : i32, i32
  }
  func.func @transform_7(%arg0: i32) -> (i32, i32) {
    %c0_i32 = arith.constant 0 : i32
    %c0_i32_0 = arith.constant 0 : i32
    %c0_i32_1 = arith.constant 0 : i32
    return %c0_i32, %c0_i32_0 : i32, i32
  }
  func.func @transform_8(%arg0: i32) -> (i32, i32) {
    %c0_i32 = arith.constant 0 : i32
    %c0_i32_0 = arith.constant 0 : i32
    %c0_i32_1 = arith.constant 0 : i32
    return %c0_i32, %c0_i32_0 : i32, i32
  }
  func.func @transform_9(%arg0: i32) -> (i32, i32) {
    %c0_i32 = arith.constant 0 : i32
    %c0_i32_0 = arith.constant 0 : i32
    return %arg0, %c0_i32 : i32, i32
  }
}

</mosaic_0001>

<llo_original>
// kernel: tpu_custom_call.1
$region0: #{tpu_custom_call.1}
  #allocation0 [shape = 'u32[]', space=smem, size = 0x4, offset = 0x4, fixed_abs, tag = 'smem constant byte address 0x4 - core index']
  #allocation1 [shape = 'u32[144,128]{1,0:T(1,128)}', space=vmem, size = 0x12000, scoped, tag = 'internal scratch']
  %s0 = inlined_call_operand.hbm [shape: bf16[16,64,128], index: 0, kind: input, shape index: {}]
  %s1 = inlined_call_operand.hbm [shape: bf16[16,64,128], index: 1, kind: input, shape index: {}]
  %s2 = inlined_call_operand.hbm [shape: bf16[16,64,128], index: 2, kind: input, shape index: {}]
  %s3 = inlined_call_operand.hbm [shape: bf16[16,64,128], index: 3, kind: input, shape index: {}]
  %s4 = inlined_call_operand.hbm [shape: f32[128,128], index: 4, kind: input, shape index: {}]
  %s5 = inlined_call_operand.hbm [shape: f32[128,128], index: 5, kind: input, shape index: {}]
  %s6 = inlined_call_operand.hbm [shape: f32[128,128], index: 6, kind: input, shape index: {}]
  %s7 = inlined_call_operand.hbm [shape: f32[128,128], index: 7, kind: input, shape index: {}]
  %s8 = inlined_call_operand.vmem [shape: f32[1,128], index: 8, kind: input, shape index: {}]
  %s9 = inlined_call_operand.hbm [shape: f32[16,128], index: 9, kind: output, shape index: {}]
  %s10 = sld [smem:[#allocation0]]
  $region101: #{tpu_custom_call.1} parent=0
    _
  %s12 = ssub.s32 1, %s10
  %s13 = scalar_select 0, %s12, %s10
  $region1: #{tpu_custom_call.1} parent=0
    #allocation2 [shape = 'u8[262144]{0}', space=vmem, size = 0x40000, scoped, tag = 'input window, operand 0']
    #allocation3 [shape = 's32[2]{0}', space=sflag, size = 0x8, scoped, tag = 'scoped memory for tpu_custom_call.1']
    #allocation4 [shape = 's32[2]{0}', space=sflag, size = 0x8, scoped, tag = 'scoped memory for tpu_custom_call.1']
    #allocation5 [shape = 'u8[262144]{0}', space=vmem, size = 0x40000, scoped, tag = 'input window, operand 1']
    #allocation6 [shape = 's32[2]{0}', space=sflag, size = 0x8, scoped, tag = 'scoped memory for tpu_custom_call.1']
    #allocation7 [shape = 'u8[262144]{0}', space=vmem, size = 0x40000, scoped, tag = 'input window, operand 2']
    #allocation8 [shape = 'u8[262144]{0}', space=vmem, size = 0x40000, scoped, tag = 'input window, operand 3']
    #allocation9 [shape = 's32[2]{0}', space=sflag, size = 0x8, scoped, tag = 'scoped memory for tpu_custom_call.1']
    #allocation10 [shape = 'u8[65536]{0}', space=vmem, size = 0x10000, scoped, tag = 'input window, operand 4, single buffered']
    #allocation11 [shape = 'u8[65536]{0}', space=vmem, size = 0x10000, scoped, tag = 'input window, operand 5, single buffered']
    #allocation12 [shape = 's32[1]{0}', space=sflag, size = 0x4, scoped, tag = 'scoped memory for tpu_custom_call.1']
    #allocation13 [shape = 'u8[65536]{0}', space=vmem, size = 0x10000, scoped, tag = 'input window, operand 6, single buffered']
    #allocation14 [shape = 'u8[65536]{0}', space=vmem, size = 0x10000, scoped, tag = 'input window, operand 7, single buffered']
    #allocation15 [shape = 's32[1]{0}', space=sflag, size = 0x4, scoped, tag = 'scoped memory for tpu_custom_call.1']
    #allocation16 [shape = 'u8[8192]{0}', space=vmem, size = 0x2000, scoped, tag = 'output window, operand 0']
    %14 = vsyncpa [#allocation3], 0
    %s15 = scalar_lea.sflag [#allocation3], 1
    %16 = vsyncpa %s15, 0
    %17 = vsyncpa [#allocation6], 0
    %s18 = scalar_lea.sflag [#allocation6], 1
    %19 = vsyncpa %s18, 0
    %20 = vsyncpa [#allocation9], 0
    %s21 = scalar_lea.sflag [#allocation9], 1
    %22 = vsyncpa %s21, 0
    %23 = vsyncpa [#allocation12], 0
    %24 = vsyncpa [#allocation15], 0
    %25 = vsyncpa [#allocation4], 0
    %s26 = scalar_lea.sflag [#allocation4], 1
    %27 = vsyncpa %s26, 0
    loop: start=0, step=1, limit=4
    $region2: #{tpu_custom_call.1} parent=1 // loop_pre_header
      _
    $region3: #{tpu_custom_call.1} parent=1 // loop_header
      %s29 = sphi 0, %s33
      %p30 = scmp.ge.s32.totalorder %s29, 4
      %s39 = sphi 0, %s41
      %s42 = sphi 0, %s39
      %s43 = sphi 0, %s42
      %s59 = sphi 0, %s43
      %s65 = sphi 0, %s67
      %s68 = sphi 0, %s65
      %s69 = sphi 0, %s68
      %s85 = sphi 0, %s69
      %s91 = sphi 0, %s93
      %s94 = sphi 0, %s91
      %s95 = sphi 0, %s94
      %s111 = sphi 0, %s95
      %s117 = sphi 0, %s119
      %s120 = sphi 0, %s117
      %s121 = sphi 0, %s120
      %s137 = sphi 0, %s121
      %s141 = sphi 0, %s141
      %s143 = sphi 0, %s141
      %s144 = sphi 0, %s143
      %s158 = sphi 0, %s144
      %s162 = sphi 0, %s162
      %s164 = sphi 0, %s162
      %s165 = sphi 0, %s164
      %s179 = sphi 0, %s165
      %s183 = sphi 0, %s183
      %s185 = sphi 0, %s183
      %s186 = sphi 0, %s185
      %s200 = sphi 0, %s186
      %s204 = sphi 0, %s204
      %s206 = sphi 0, %s204
      %s207 = sphi 0, %s206
      %s221 = sphi 0, %s207
      %s225 = sphi 0, %s225
      %s227 = sphi 0, %s225
      %s228 = sphi 0, %s227
      %s242 = sphi 0, %s228
      %s248 = sphi 0, %s250
      %s251 = sphi 0, %s248
      %s252 = sphi 0, %s251
      %s268 = sphi 0, %s252
    $region4: #{tpu_custom_call.1} parent=1 // loop_header_branch
      %32 = sbr.rel (%p30) target = $region8
    $region5: #{tpu_custom_call.1} parent=1 // loop_body
      %s34 = ssub.s32 %s29, 1
      %s35 = ssub.s32 %s29, 2
      %s36 = sadd.s32 %s29, 1
      %s37 = ssub.s32 %s29, %s36
      %p38 = scmp.eq.s32.totalorder %s37, 0
      %s40 = sadd.s32 %s39, 1
      %s41 = scalar_select %p38, %s39, %s40
      %p44 = pneg %p38
      %p45 = scmp.eq.s32.totalorder %s29, 1
      %p46 = por %p44, %p45
      %p47 = scmp.ne.s32.totalorder %s39, %s42
      %p48 = scmp.eq.s32.totalorder %s29, 0
      %p49 = por %p47, %p48
      %p50 = scmp.ne.s32.totalorder %s39, %s42
      %p51 = scmp.eq.s32.totalorder %s34, 1
      %p52 = por %p50, %p51
      %p53 = scmp.ne.s32.totalorder %s42, %s43
      %p54 = scmp.eq.s32.totalorder %s34, 0
      %p55 = por %p53, %p54
      %p56 = scmp.ne.s32.totalorder %s42, %s43
      %p57 = scmp.eq.s32.totalorder %s35, 1
      %p58 = por %p56, %p57
      %p60 = scmp.ne.s32.totalorder %s43, %s59
      %p61 = scmp.eq.s32.totalorder %s35, 0
      %p62 = por %p60, %p61
      %s63 = ssub.s32 %s29, %s36
      %p64 = scmp.eq.s32.totalorder %s63, 0
      %s66 = sadd.s32 %s65, 1
      %s67 = scalar_select %p64, %s65, %s66
      %p70 = pneg %p64
      %p71 = scmp.eq.s32.totalorder %s29, 1
      %p72 = por %p70, %p71
      %p73 = scmp.ne.s32.totalorder %s65, %s68
      %p74 = scmp.eq.s32.totalorder %s29, 0
      %p75 = por %p73, %p74
      %p76 = scmp.ne.s32.totalorder %s65, %s68
      %p77 = scmp.eq.s32.totalorder %s34, 1
      %p78 = por %p76, %p77
      %p79 = scmp.ne.s32.totalorder %s68, %s69
      %p80 = scmp.eq.s32.totalorder %s34, 0
      %p81 = por %p79, %p80
      %p82 = scmp.ne.s32.totalorder %s68, %s69
      %p83 = scmp.eq.s32.totalorder %s35, 1
      %p84 = por %p82, %p83
      %p86 = scmp.ne.s32.totalorder %s69, %s85
      %p87 = scmp.eq.s32.totalorder %s35, 0
      %p88 = por %p86, %p87
      %s89 = ssub.s32 %s29, %s36
      %p90 = scmp.eq.s32.totalorder %s89, 0
      %s92 = sadd.s32 %s91, 1
      %s93 = scalar_select %p90, %s91, %s92
      %p96 = pneg %p90
      %p97 = scmp.eq.s32.totalorder %s29, 1
      %p98 = por %p96, %p97
      %p99 = scmp.ne.s32.totalorder %s91, %s94
      %p100 = scmp.eq.s32.totalorder %s29, 0
      %p101 = por %p99, %p100
      %p102 = scmp.ne.s32.totalorder %s91, %s94
      %p103 = scmp.eq.s32.totalorder %s34, 1
      %p104 = por %p102, %p103
      %p105 = scmp.ne.s32.totalorder %s94, %s95
      %p106 = scmp.eq.s32.totalorder %s34, 0
      %p107 = por %p105, %p106
      %p108 = scmp.ne.s32.totalorder %s94, %s95
      %p109 = scmp.eq.s32.totalorder %s35, 1
      %p110 = por %p108, %p109
      %p112 = scmp.ne.s32.totalorder %s95, %s111
      %p113 = scmp.eq.s32.totalorder %s35, 0
      %p114 = por %p112, %p113
      %s115 = ssub.s32 %s29, %s36
      %p116 = scmp.eq.s32.totalorder %s115, 0
      %s118 = sadd.s32 %s117, 1
      %s119 = scalar_select %p116, %s117, %s118
      %p122 = pneg %p116
      %p123 = scmp.eq.s32.totalorder %s29, 1
      %p124 = por %p122, %p123
      %p125 = scmp.ne.s32.totalorder %s117, %s120
      %p126 = scmp.eq.s32.totalorder %s29, 0
      %p127 = por %p125, %p126
      %p128 = scmp.ne.s32.totalorder %s117, %s120
      %p129 = scmp.eq.s32.totalorder %s34, 1
      %p130 = por %p128, %p129
      %p131 = scmp.ne.s32.totalorder %s120, %s121
      %p132 = scmp.eq.s32.totalorder %s34, 0
      %p133 = por %p131, %p132
      %p134 = scmp.ne.s32.totalorder %s120, %s121
      %p135 = scmp.eq.s32.totalorder %s35, 1
      %p136 = por %p134, %p135
      %p138 = scmp.ne.s32.totalorder %s121, %s137
      %p139 = scmp.eq.s32.totalorder %s35, 0
      %p140 = por %p138, %p139
      %s142 = sadd.s32 %s141, 1
      %p145 = scmp.eq.s32.totalorder %s29, 1
      %p146 = scmp.ne.s32.totalorder %s141, %s143
      %p147 = scmp.eq.s32.totalorder %s29, 0
      %p148 = por %p146, %p147
      %p149 = scmp.ne.s32.totalorder %s141, %s143
      %p150 = scmp.eq.s32.totalorder %s34, 1
      %p151 = por %p149, %p150
      %p152 = scmp.ne.s32.totalorder %s143, %s144
      %p153 = scmp.eq.s32.totalorder %s34, 0
      %p154 = por %p152, %p153
      %p155 = scmp.ne.s32.totalorder %s143, %s144
      %p156 = scmp.eq.s32.totalorder %s35, 1
      %p157 = por %p155, %p156
      %p159 = scmp.ne.s32.totalorder %s144, %s158
      %p160 = scmp.eq.s32.totalorder %s35, 0
      %p161 = por %p159, %p160
      %s163 = sadd.s32 %s162, 1
      %p166 = scmp.eq.s32.totalorder %s29, 1
      %p167 = scmp.ne.s32.totalorder %s162, %s164
      %p168 = scmp.eq.s32.totalorder %s29, 0
      %p169 = por %p167, %p168
      %p170 = scmp.ne.s32.totalorder %s162, %s164
      %p171 = scmp.eq.s32.totalorder %s34, 1
      %p172 = por %p170, %p171
      %p173 = scmp.ne.s32.totalorder %s164, %s165
      %p174 = scmp.eq.s32.totalorder %s34, 0
      %p175 = por %p173, %p174
      %p176 = scmp.ne.s32.totalorder %s164, %s165
      %p177 = scmp.eq.s32.totalorder %s35, 1
      %p178 = por %p176, %p177
      %p180 = scmp.ne.s32.totalorder %s165, %s179
      %p181 = scmp.eq.s32.totalorder %s35, 0
      %p182 = por %p180, %p181
      %s184 = sadd.s32 %s183, 1
      %p187 = scmp.eq.s32.totalorder %s29, 1
      %p188 = scmp.ne.s32.totalorder %s183, %s185
      %p189 = scmp.eq.s32.totalorder %s29, 0
      %p190 = por %p188, %p189
      %p191 = scmp.ne.s32.totalorder %s183, %s185
      %p192 = scmp.eq.s32.totalorder %s34, 1
      %p193 = por %p191, %p192
      %p194 = scmp.ne.s32.totalorder %s185, %s186
      %p195 = scmp.eq.s32.totalorder %s34, 0
      %p196 = por %p194, %p195
      %p197 = scmp.ne.s32.totalorder %s185, %s186
      %p198 = scmp.eq.s32.totalorder %s35, 1
      %p199 = por %p197, %p198
      %p201 = scmp.ne.s32.totalorder %s186, %s200
      %p202 = scmp.eq.s32.totalorder %s35, 0
      %p203 = por %p201, %p202
      %s205 = sadd.s32 %s204, 1
      %p208 = scmp.eq.s32.totalorder %s29, 1
      %p209 = scmp.ne.s32.totalorder %s204, %s206
      %p210 = scmp.eq.s32.totalorder %s29, 0
      %p211 = por %p209, %p210
      %p212 = scmp.ne.s32.totalorder %s204, %s206
      %p213 = scmp.eq.s32.totalorder %s34, 1
      %p214 = por %p212, %p213
      %p215 = scmp.ne.s32.totalorder %s206, %s207
      %p216 = scmp.eq.s32.totalorder %s34, 0
      %p217 = por %p215, %p216
      %p218 = scmp.ne.s32.totalorder %s206, %s207
      %p219 = scmp.eq.s32.totalorder %s35, 1
      %p220 = por %p218, %p219
      %p222 = scmp.ne.s32.totalorder %s207, %s221
      %p223 = scmp.eq.s32.totalorder %s35, 0
      %p224 = por %p222, %p223
      %s226 = sadd.s32 %s225, 1
      %p229 = scmp.eq.s32.totalorder %s29, 1
      %p230 = scmp.ne.s32.totalorder %s225, %s227
      %p231 = scmp.eq.s32.totalorder %s29, 0
      %p232 = por %p230, %p231
      %p233 = scmp.ne.s32.totalorder %s225, %s227
      %p234 = scmp.eq.s32.totalorder %s34, 1
      %p235 = por %p233, %p234
      %p236 = scmp.ne.s32.totalorder %s227, %s228
      %p237 = scmp.eq.s32.totalorder %s34, 0
      %p238 = por %p236, %p237
      %p239 = scmp.ne.s32.totalorder %s227, %s228
      %p240 = scmp.eq.s32.totalorder %s35, 1
      %p241 = por %p239, %p240
      %p243 = scmp.ne.s32.totalorder %s228, %s242
      %p244 = scmp.eq.s32.totalorder %s35, 0
      %p245 = por %p243, %p244
      %s246 = ssub.s32 %s29, %s36
      %p247 = scmp.eq.s32.totalorder %s246, 0
      %s249 = sadd.s32 %s248, 1
      %s250 = scalar_select %p247, %s248, %s249
      %p253 = pneg %p247
      %p254 = scmp.eq.s32.totalorder %s29, 1
      %p255 = por %p253, %p254
      %p256 = scmp.ne.s32.totalorder %s248, %s251
      %p257 = scmp.eq.s32.totalorder %s29, 0
      %p258 = por %p256, %p257
      %p259 = scmp.ne.s32.totalorder %s248, %s251
      %p260 = scmp.eq.s32.totalorder %s34, 1
      %p261 = por %p259, %p260
      %p262 = scmp.ne.s32.totalorder %s251, %s252
      %p263 = scmp.eq.s32.totalorder %s34, 0
      %p264 = por %p262, %p263
      %p265 = scmp.ne.s32.totalorder %s251, %s252
      %p266 = scmp.eq.s32.totalorder %s35, 1
      %p267 = por %p265, %p266
      %p269 = scmp.ne.s32.totalorder %s252, %s268
      %p270 = scmp.eq.s32.totalorder %s35, 0
      %p271 = por %p269, %p270
      %p272 = scmp.le.s32.totalorder 1, %s29
      %p273 = scmp.lt.s32.totalorder %s29, 3
      %p274 = pnand %p272, %p273
      %p275 = pneg %p274
      // Predicated region
      $region9: #{tpu_custom_call.1} parent=5 // pred_check
        _
      $region10: #{tpu_custom_call.1} parent=5 // pred_check_branch
        %277 = sbr.rel (%p274) target = $region12
      $region11: #{tpu_custom_call.1} parent=5 // pred_region
        %s278 = ssub.s32 %s29, 1
        // Predicated region
        $region13: #{tpu_custom_call.1} parent=11 // pred_check
          %p279 = pneg %p154
        $region14: #{tpu_custom_call.1} parent=11 // pred_check_branch
          %281 = sbr.rel (%p279) target = $region16
        $region15: #{tpu_custom_call.1} parent=11 // pred_region
          %s283 = ssub.s32 2048, 2048
          %284 = vsyncadd [#allocation9], %s283
          %s285 = sshll.u32 [#allocation10], 4
          %s286 = int_to_ptr.vmem [resolvable:$true] %s285
          %291 = dma.hbm_to_vmem [thread:$0]  %s4, 2048, %s286, [#allocation9], 128, 128, 8
        $region16: #{tpu_custom_call.1} parent=11 // pred_fallthru
          _
        // Predicated region
        $region17: #{tpu_custom_call.1} parent=11 // pred_check
          %p292 = pneg %p175
        $region18: #{tpu_custom_call.1} parent=11 // pred_check_branch
          %294 = sbr.rel (%p292) target = $region20
        $region19: #{tpu_custom_call.1} parent=11 // pred_region
          %s296 = ssub.s32 2048, 2048
          %297 = vsyncadd [#allocation12], %s296
          %s298 = sshll.u32 [#allocation11], 4
          %s299 = int_to_ptr.vmem [resolvable:$true] %s298
          %304 = dma.hbm_to_vmem [thread:$0]  %s5, 2048, %s299, [#allocation12], 128, 128, 8
        $region20: #{tpu_custom_call.1} parent=11 // pred_fallthru
          _
        // Predicated region
        $region21: #{tpu_custom_call.1} parent=11 // pred_check
          %p305 = pneg %p196
        $region22: #{tpu_custom_call.1} parent=11 // pred_check_branch
          %307 = sbr.rel (%p305) target = $region24
        $region23: #{tpu_custom_call.1} parent=11 // pred_region
          %s309 = ssub.s32 2048, 2048
          %310 = vsyncadd [#allocation12], %s309
          %s311 = sshll.u32 [#allocation13], 4
          %s312 = int_to_ptr.vmem [resolvable:$true] %s311
          %317 = dma.hbm_to_vmem [thread:$0]  %s6, 2048, %s312, [#allocation12], 128, 128, 8
        $region24: #{tpu_custom_call.1} parent=11 // pred_fallthru
          _
        // Predicated region
        $region25: #{tpu_custom_call.1} parent=11 // pred_check
          %p318 = pneg %p217
        $region26: #{tpu_custom_call.1} parent=11 // pred_check_branch
          %320 = sbr.rel (%p318) target = $region28
        $region27: #{tpu_custom_call.1} parent=11 // pred_region
          %s322 = ssub.s32 2048, 2048
          %323 = vsyncadd [#allocation15], %s322
          %s324 = sshll.u32 [#allocation14], 4
          %s325 = int_to_ptr.vmem [resolvable:$true] %s324
          %330 = dma.hbm_to_vmem [thread:$0]  %s7, 2048, %s325, [#allocation15], 128, 128, 8
        $region28: #{tpu_custom_call.1} parent=11 // pred_fallthru
          _
        // Predicated region
        $region29: #{tpu_custom_call.1} parent=11 // pred_check
          %p331 = pneg %p238
        $region30: #{tpu_custom_call.1} parent=11 // pred_check_branch
          %333 = sbr.rel (%p331) target = $region32
        $region31: #{tpu_custom_call.1} parent=11 // pred_region
          _
        $region32: #{tpu_custom_call.1} parent=11 // pred_fallthru
          _
      $region12: #{tpu_custom_call.1} parent=5 // pred_fallthru
        _
      %p334 = scmp.lt.s32.totalorder %s29, 2
      // Predicated region
      $region33: #{tpu_custom_call.1} parent=5 // pred_check
        %p335 = pneg %p334
      $region34: #{tpu_custom_call.1} parent=5 // pred_check_branch
        %337 = sbr.rel (%p335) target = $region36
      $region35: #{tpu_custom_call.1} parent=5 // pred_region
        // Predicated region
        $region37: #{tpu_custom_call.1} parent=35 // pred_check
          %p338 = pneg %p49
        $region38: #{tpu_custom_call.1} parent=35 // pred_check_branch
          %340 = sbr.rel (%p338) target = $region40
        $region39: #{tpu_custom_call.1} parent=35 // pred_region
          %s341 = sand.u32 %s39, 1
          %s342 = scalar_lea.sflag [#allocation3], %s341
          %s343 = sand.u32 %s39, 1
          %s344 = smul.addr %s343, 256
          %s345 = scalar_lea.vmem [#allocation2], %s344
          %s346 = smul.u32 8, %s29
          %s348 = ssub.s32 4096, 4096
          %349 = vsyncadd %s342, %s348
          %s350 = smul.addr %s346, 8
          %s351 = smul.addr %s350, 64
          %s352 = scalar_lea.hbm %s0, %s351
          %s353 = sshll.u32 %s345, 4
          %s354 = int_to_ptr.vmem [resolvable:$true] %s353
          %359 = dma.hbm_to_vmem [thread:$0]  %s352, 4096, %s354, %s342, 64, 64, 4
        $region40: #{tpu_custom_call.1} parent=35 // pred_fallthru
          _
        // Predicated region
        $region41: #{tpu_custom_call.1} parent=35 // pred_check
          %p360 = pneg %p75
        $region42: #{tpu_custom_call.1} parent=35 // pred_check_branch
          %362 = sbr.rel (%p360) target = $region44
        $region43: #{tpu_custom_call.1} parent=35 // pred_region
          %s363 = sand.u32 %s29, 1
          %s364 = scalar_lea.sflag [#allocation6], %s363
          %s365 = sand.u32 %s65, 1
          %s366 = smul.addr %s365, 256
          %s367 = scalar_lea.vmem [#allocation5], %s366
          %s368 = smul.u32 8, %s29
          %s370 = ssub.s32 4096, 4096
          %371 = vsyncadd %s364, %s370
          %s372 = smul.addr %s368, 8
          %s373 = smul.addr %s372, 64
          %s374 = scalar_lea.hbm %s1, %s373
          %s375 = sshll.u32 %s367, 4
          %s376 = int_to_ptr.vmem [resolvable:$true] %s375
          %381 = dma.hbm_to_vmem [thread:$0]  %s374, 4096, %s376, %s364, 64, 64, 4
        $region44: #{tpu_custom_call.1} parent=35 // pred_fallthru
          _
        // Predicated region
        $region45: #{tpu_custom_call.1} parent=35 // pred_check
          %p382 = pneg %p101
        $region46: #{tpu_custom_call.1} parent=35 // pred_check_branch
          %384 = sbr.rel (%p382) target = $region48
        $region47: #{tpu_custom_call.1} parent=35 // pred_region
          %s385 = sand.u32 %s29, 1
          %s386 = scalar_lea.sflag [#allocation6], %s385
          %s387 = sand.u32 %s91, 1
          %s388 = smul.addr %s387, 256
          %s389 = scalar_lea.vmem [#allocation7], %s388
          %s390 = smul.u32 8, %s29
          %s392 = ssub.s32 4096, 4096
          %393 = vsyncadd %s386, %s392
          %s394 = smul.addr %s390, 8
          %s395 = smul.addr %s394, 64
          %s396 = scalar_lea.hbm %s2, %s395
          %s397 = sshll.u32 %s389, 4
          %s398 = int_to_ptr.vmem [resolvable:$true] %s397
          %403 = dma.hbm_to_vmem [thread:$0]  %s396, 4096, %s398, %s386, 64, 64, 4
        $region48: #{tpu_custom_call.1} parent=35 // pred_fallthru
          _
        // Predicated region
        $region49: #{tpu_custom_call.1} parent=35 // pred_check
          %p404 = pneg %p127
        $region50: #{tpu_custom_call.1} parent=35 // pred_check_branch
          %406 = sbr.rel (%p404) target = $region52
        $region51: #{tpu_custom_call.1} parent=35 // pred_region
          %s407 = sand.u32 %s29, 1
          %s408 = scalar_lea.sflag [#allocation9], %s407
          %s409 = sand.u32 %s117, 1
          %s410 = smul.addr %s409, 256
          %s411 = scalar_lea.vmem [#allocation8], %s410
          %s412 = smul.u32 8, %s29
          %s414 = ssub.s32 4096, 4096
          %415 = vsyncadd %s408, %s414
          %s416 = smul.addr %s412, 8
          %s417 = smul.addr %s416, 64
          %s418 = scalar_lea.hbm %s3, %s417
          %s419 = sshll.u32 %s411, 4
          %s420 = int_to_ptr.vmem [resolvable:$true] %s419
          %425 = dma.hbm_to_vmem [thread:$0]  %s418, 4096, %s420, %s408, 64, 64, 4
        $region52: #{tpu_custom_call.1} parent=35 // pred_fallthru
          _
      $region36: #{tpu_custom_call.1} parent=5 // pred_fallthru
        _
      %p426 = scmp.le.s32.totalorder 1, %s29
      %p427 = scmp.lt.s32.totalorder %s29, 3
      %p428 = pnand %p426, %p427
      %p429 = pneg %p428
      // Predicated region
      $region53: #{tpu_custom_call.1} parent=5 // pred_check
        _
      $region54: #{tpu_custom_call.1} parent=5 // pred_check_branch
        %431 = sbr.rel (%p428) target = $region56
      $region55: #{tpu_custom_call.1} parent=5 // pred_region
        %s432 = ssub.s32 %s29, 1
        %s433 = sand.u32 %s42, 1
        %s434 = scalar_lea.sflag [#allocation3], %s433
        %s435 = sand.u32 %s42, 1
        %s436 = smul.addr %s435, 256
        %s437 = scalar_lea.vmem [#allocation2], %s436
        // Predicated region
        $region57: #{tpu_custom_call.1} parent=55 // pred_check
          %p438 = pneg %p55
        $region58: #{tpu_custom_call.1} parent=55 // pred_check_branch
          %440 = sbr.rel (%p438) target = $region60
        $region59: #{tpu_custom_call.1} parent=55 // pred_region
          %441 = dma.done %s434, 4096
        $region60: #{tpu_custom_call.1} parent=55 // pred_fallthru
          _
        %s442 = sand.u32 %s34, 1
        %s443 = scalar_lea.sflag [#allocation6], %s442
        %s444 = sand.u32 %s68, 1
        %s445 = smul.addr %s444, 256
        %s446 = scalar_lea.vmem [#allocation5], %s445
        // Predicated region
        $region61: #{tpu_custom_call.1} parent=55 // pred_check
          %p447 = pneg %p81
        $region62: #{tpu_custom_call.1} parent=55 // pred_check_branch
          %449 = sbr.rel (%p447) target = $region64
        $region63: #{tpu_custom_call.1} parent=55 // pred_region
          %450 = dma.done %s443, 4096
        $region64: #{tpu_custom_call.1} parent=55 // pred_fallthru
          _
        %s451 = sand.u32 %s34, 1
        %s452 = scalar_lea.sflag [#allocation6], %s451
        %s453 = sand.u32 %s94, 1
        %s454 = smul.addr %s453, 256
        %s455 = scalar_lea.vmem [#allocation7], %s454
        // Predicated region
        $region65: #{tpu_custom_call.1} parent=55 // pred_check
          %p456 = pneg %p107
        $region66: #{tpu_custom_call.1} parent=55 // pred_check_branch
          %458 = sbr.rel (%p456) target = $region68
        $region67: #{tpu_custom_call.1} parent=55 // pred_region
          %459 = dma.done %s452, 4096
        $region68: #{tpu_custom_call.1} parent=55 // pred_fallthru
          _
        %s460 = sand.u32 %s34, 1
        %s461 = scalar_lea.sflag [#allocation9], %s460
        %s462 = sand.u32 %s120, 1
        %s463 = smul.addr %s462, 256
        %s464 = scalar_lea.vmem [#allocation8], %s463
        // Predicated region
        $region69: #{tpu_custom_call.1} parent=55 // pred_check
          %p465 = pneg %p133
        $region70: #{tpu_custom_call.1} parent=55 // pred_check_branch
          %467 = sbr.rel (%p465) target = $region72
        $region71: #{tpu_custom_call.1} parent=55 // pred_region
          %468 = dma.done %s461, 4096
        $region72: #{tpu_custom_call.1} parent=55 // pred_fallthru
          _
        // Predicated region
        $region73: #{tpu_custom_call.1} parent=55 // pred_check
          %p469 = pneg %p154
        $region74: #{tpu_custom_call.1} parent=55 // pred_check_branch
          %471 = sbr.rel (%p469) target = $region76
        $region75: #{tpu_custom_call.1} parent=55 // pred_region
          %472 = dma.done [#allocation9], 2048
        $region76: #{tpu_custom_call.1} parent=55 // pred_fallthru
          _
        // Predicated region
        $region77: #{tpu_custom_call.1} parent=55 // pred_check
          %p473 = pneg %p175
        $region78: #{tpu_custom_call.1} parent=55 // pred_check_branch
          %475 = sbr.rel (%p473) target = $region80
        $region79: #{tpu_custom_call.1} parent=55 // pred_region
          %476 = dma.done [#allocation12], 2048
        $region80: #{tpu_custom_call.1} parent=55 // pred_fallthru
          _
        // Predicated region
        $region81: #{tpu_custom_call.1} parent=55 // pred_check
          %p477 = pneg %p196
        $region82: #{tpu_custom_call.1} parent=55 // pred_check_branch
          %479 = sbr.rel (%p477) target = $region84
        $region83: #{tpu_custom_call.1} parent=55 // pred_region
          %480 = dma.done [#allocation12], 2048
        $region84: #{tpu_custom_call.1} parent=55 // pred_fallthru
          _
        // Predicated region
        $region85: #{tpu_custom_call.1} parent=55 // pred_check
          %p481 = pneg %p217
        $region86: #{tpu_custom_call.1} parent=55 // pred_check_branch
          %483 = sbr.rel (%p481) target = $region88
        $region87: #{tpu_custom_call.1} parent=55 // pred_region
          %484 = dma.done [#allocation15], 2048
        $region88: #{tpu_custom_call.1} parent=55 // pred_fallthru
          _
        %s485 = sand.u32 %s42, 1
        %s486 = scalar_lea.sflag [#allocation3], %s485
        %s487 = sand.u32 %s42, 1
        %s488 = smul.addr %s487, 256
        %s489 = scalar_lea.vmem [#allocation2], %s488
        %p490 = pneg %p55
        %p491 = pneg %p52
        %s492 = sand.u32 %s34, 1
        %s493 = scalar_lea.sflag [#allocation6], %s492
        %s494 = sand.u32 %s68, 1
        %s495 = smul.addr %s494, 256
        %s496 = scalar_lea.vmem [#allocation5], %s495
        %p497 = pneg %p81
        %p498 = pneg %p78
        %s499 = sand.u32 %s34, 1
        %s500 = scalar_lea.sflag [#allocation6], %s499
        %s501 = sand.u32 %s94, 1
        %s502 = smul.addr %s501, 256
        %s503 = scalar_lea.vmem [#allocation7], %s502
        %p504 = pneg %p107
        %p505 = pneg %p104
        %s506 = sand.u32 %s34, 1
        %s507 = scalar_lea.sflag [#allocation9], %s506
        %s508 = sand.u32 %s120, 1
        %s509 = smul.addr %s508, 256
        %s510 = scalar_lea.vmem [#allocation8], %s509
        %p511 = pneg %p133
        %p512 = pneg %p130
        %p513 = pneg %p154
        %p514 = pneg %p151
        %p515 = pneg %p175
        %p516 = pneg %p172
        %p517 = pneg %p196
        %p518 = pneg %p193
        %p519 = pneg %p217
        %p520 = pneg %p214
        %p521 = pneg %p238
        %p522 = pneg %p235
        %p523 = pneg %p264
        %p524 = pneg %p261
        %s525 = sand.u32 %s251, 1
        %s526 = scalar_lea.sflag [#allocation4], %s525
        %s527 = sand.u32 %s251, 1
        %s528 = smul.addr %s527, 8
        %s529 = scalar_lea.vmem [#allocation16], %s528
        %s530 = smul.u32 8, %s34
        %s531 = smul.u32 8, %s34
        %s532 = smul.u32 8, %s34
        %s533 = smul.u32 8, %s34
        %v534 = vld [vmem:[%s437] sm:$0xf]
        %v535 = vld [vmem:[%s437 + $0x4] sm:$0xf]
        %v536 = vld [vmem:[%s437 + $0x8] sm:$0xf]
        %v537 = vld [vmem:[%s437 + $0xc] sm:$0xf]
        %v538 = vld [vmem:[%s437 + $0x10] sm:$0xf]
        %v539 = vld [vmem:[%s437 + $0x14] sm:$0xf]
        %v540 = vld [vmem:[%s437 + $0x18] sm:$0xf]
        %v541 = vld [vmem:[%s437 + $0x1c] sm:$0xf]
        %v542 = vld [vmem:[%s437 + $0x20] sm:$0xf]
        %v543 = vld [vmem:[%s437 + $0x24] sm:$0xf]
        %v544 = vld [vmem:[%s437 + $0x28] sm:$0xf]
        %v545 = vld [vmem:[%s437 + $0x2c] sm:$0xf]
        %v546 = vld [vmem:[%s437 + $0x30] sm:$0xf]
        %v547 = vld [vmem:[%s437 + $0x34] sm:$0xf]
        %v548 = vld [vmem:[%s437 + $0x38] sm:$0xf]
        %v549 = vld [vmem:[%s437 + $0x3c] sm:$0xf]
        %v550 = vld [vmem:[%s437 + $0x40] sm:$0xf]
        %v551 = vld [vmem:[%s437 + $0x44] sm:$0xf]
        %v552 = vld [vmem:[%s437 + $0x48] sm:$0xf]
        %v553 = vld [vmem:[%s437 + $0x4c] sm:$0xf]
        %v554 = vld [vmem:[%s437 + $0x50] sm:$0xf]
        %v555 = vld [vmem:[%s437 + $0x54] sm:$0xf]
        %v556 = vld [vmem:[%s437 + $0x58] sm:$0xf]
        %v557 = vld [vmem:[%s437 + $0x5c] sm:$0xf]
        %v558 = vld [vmem:[%s437 + $0x60] sm:$0xf]
        %v559 = vld [vmem:[%s437 + $0x64] sm:$0xf]
        %v560 = vld [vmem:[%s437 + $0x68] sm:$0xf]
        %v561 = vld [vmem:[%s437 + $0x6c] sm:$0xf]
        %v562 = vld [vmem:[%s437 + $0x70] sm:$0xf]
        %v563 = vld [vmem:[%s437 + $0x74] sm:$0xf]
        %v564 = vld [vmem:[%s437 + $0x78] sm:$0xf]
        %v565 = vld [vmem:[%s437 + $0x7c] sm:$0xf]
        %v566 = vld [vmem:[%s437 + $0x80] sm:$0xf]
        %v567 = vld [vmem:[%s437 + $0x84] sm:$0xf]
        %v568 = vld [vmem:[%s437 + $0x88] sm:$0xf]
        %v569 = vld [vmem:[%s437 + $0x8c] sm:$0xf]
        %v570 = vld [vmem:[%s437 + $0x90] sm:$0xf]
        %v571 = vld [vmem:[%s437 + $0x94] sm:$0xf]
        %v572 = vld [vmem:[%s437 + $0x98] sm:$0xf]
        %v573 = vld [vmem:[%s437 + $0x9c] sm:$0xf]
        %v574 = vld [vmem:[%s437 + $0xa0] sm:$0xf]
        %v575 = vld [vmem:[%s437 + $0xa4] sm:$0xf]
        %v576 = vld [vmem:[%s437 + $0xa8] sm:$0xf]
        %v577 = vld [vmem:[%s437 + $0xac] sm:$0xf]
        %v578 = vld [vmem:[%s437 + $0xb0] sm:$0xf]
        %v579 = vld [vmem:[%s437 + $0xb4] sm:$0xf]
        %v580 = vld [vmem:[%s437 + $0xb8] sm:$0xf]
        %v581 = vld [vmem:[%s437 + $0xbc] sm:$0xf]
        %v582 = vld [vmem:[%s437 + $0xc0] sm:$0xf]
        %v583 = vld [vmem:[%s437 + $0xc4] sm:$0xf]
        %v584 = vld [vmem:[%s437 + $0xc8] sm:$0xf]
        %v585 = vld [vmem:[%s437 + $0xcc] sm:$0xf]
        %v586 = vld [vmem:[%s437 + $0xd0] sm:$0xf]
        %v587 = vld [vmem:[%s437 + $0xd4] sm:$0xf]
        %v588 = vld [vmem:[%s437 + $0xd8] sm:$0xf]
        %v589 = vld [vmem:[%s437 + $0xdc] sm:$0xf]
        %v590 = vld [vmem:[%s437 + $0xe0] sm:$0xf]
        %v591 = vld [vmem:[%s437 + $0xe4] sm:$0xf]
        %v592 = vld [vmem:[%s437 + $0xe8] sm:$0xf]
        %v593 = vld [vmem:[%s437 + $0xec] sm:$0xf]
        %v594 = vld [vmem:[%s437 + $0xf0] sm:$0xf]
        %v595 = vld [vmem:[%s437 + $0xf4] sm:$0xf]
        %v596 = vld [vmem:[%s437 + $0xf8] sm:$0xf]
        %v597 = vld [vmem:[%s437 + $0xfc] sm:$0xf]
        %v598 = vunpack.c.l.bf16 %v534
        %v599 = vunpack.c.l.bf16 %v535
        %v600 = vunpack.c.l.bf16 %v536
        %v601 = vunpack.c.l.bf16 %v537
        %v602 = vunpack.c.l.bf16 %v538
        %v603 = vunpack.c.l.bf16 %v539
        %v604 = vunpack.c.l.bf16 %v540
        %v605 = vunpack.c.l.bf16 %v541
        %v606 = vunpack.c.l.bf16 %v542
        %v607 = vunpack.c.l.bf16 %v543
        %v608 = vunpack.c.l.bf16 %v544
        %v609 = vunpack.c.l.bf16 %v545
        %v610 = vunpack.c.l.bf16 %v546
        %v611 = vunpack.c.l.bf16 %v547
        %v612 = vunpack.c.l.bf16 %v548
        %v613 = vunpack.c.l.bf16 %v549
        %v614 = vunpack.c.l.bf16 %v550
        %v615 = vunpack.c.l.bf16 %v551
        %v616 = vunpack.c.l.bf16 %v552
        %v617 = vunpack.c.l.bf16 %v553
        %v618 = vunpack.c.l.bf16 %v554
        %v619 = vunpack.c.l.bf16 %v555
        %v620 = vunpack.c.l.bf16 %v556
        %v621 = vunpack.c.l.bf16 %v557
        %v622 = vunpack.c.l.bf16 %v558
        %v623 = vunpack.c.l.bf16 %v559
        %v624 = vunpack.c.l.bf16 %v560
        %v625 = vunpack.c.l.bf16 %v561
        %v626 = vunpack.c.l.bf16 %v562
        %v627 = vunpack.c.l.bf16 %v563
        %v628 = vunpack.c.l.bf16 %v564
        %v629 = vunpack.c.l.bf16 %v565
        %v630 = vunpack.c.l.bf16 %v566
        %v631 = vunpack.c.l.bf16 %v567
        %v632 = vunpack.c.l.bf16 %v568
        %v633 = vunpack.c.l.bf16 %v569
        %v634 = vunpack.c.l.bf16 %v570
        %v635 = vunpack.c.l.bf16 %v571
        %v636 = vunpack.c.l.bf16 %v572
        %v637 = vunpack.c.l.bf16 %v573
        %v638 = vunpack.c.l.bf16 %v574
        %v639 = vunpack.c.l.bf16 %v575
        %v640 = vunpack.c.l.bf16 %v576
        %v641 = vunpack.c.l.bf16 %v577
        %v642 = vunpack.c.l.bf16 %v578
        %v643 = vunpack.c.l.bf16 %v579
        %v644 = vunpack.c.l.bf16 %v580
        %v645 = vunpack.c.l.bf16 %v581
        %v646 = vunpack.c.l.bf16 %v582
        %v647 = vunpack.c.l.bf16 %v583
        %v648 = vunpack.c.l.bf16 %v584
        %v649 = vunpack.c.l.bf16 %v585
        %v650 = vunpack.c.l.bf16 %v586
        %v651 = vunpack.c.l.bf16 %v587
        %v652 = vunpack.c.l.bf16 %v588
        %v653 = vunpack.c.l.bf16 %v589
        %v654 = vunpack.c.l.bf16 %v590
        %v655 = vunpack.c.l.bf16 %v591
        %v656 = vunpack.c.l.bf16 %v592
        %v657 = vunpack.c.l.bf16 %v593
        %v658 = vunpack.c.l.bf16 %v594
        %v659 = vunpack.c.l.bf16 %v595
        %v660 = vunpack.c.l.bf16 %v596
        %v661 = vunpack.c.l.bf16 %v597
        %v662 = vadd.f32 %v598, %v599
        %v663 = vadd.f32 %v662, %v600
        %v664 = vadd.f32 %v663, %v601
        %v665 = vadd.f32 %v664, %v602
        %v666 = vadd.f32 %v665, %v603
        %v667 = vadd.f32 %v666, %v604
        %v668 = vadd.f32 %v667, %v605
        %v669 = vrot.slane %v668, 4
        %v670 = vadd.f32 %v668, %v669
        %v671 = vrot.slane %v670, 2
        %v672 = vadd.f32 %v670, %v671
        %v673 = vrot.slane %v672, 1
        %v674 = vadd.f32 %v672, %v673
        %v675 = vadd.f32 %v606, %v607
        %v676 = vadd.f32 %v675, %v608
        %v677 = vadd.f32 %v676, %v609
        %v678 = vadd.f32 %v677, %v610
        %v679 = vadd.f32 %v678, %v611
        %v680 = vadd.f32 %v679, %v612
        %v681 = vadd.f32 %v680, %v613
        %v682 = vrot.slane %v681, 4
        %v683 = vadd.f32 %v681, %v682
        %v684 = vrot.slane %v683, 2
        %v685 = vadd.f32 %v683, %v684
        %v686 = vrot.slane %v685, 1
        %v687 = vadd.f32 %v685, %v686
        %v688 = vadd.f32 %v614, %v615
        %v689 = vadd.f32 %v688, %v616
        %v690 = vadd.f32 %v689, %v617
        %v691 = vadd.f32 %v690, %v618
        %v692 = vadd.f32 %v691, %v619
        %v693 = vadd.f32 %v692, %v620
        %v694 = vadd.f32 %v693, %v621
        %v695 = vrot.slane %v694, 4
        %v696 = vadd.f32 %v694, %v695
        %v697 = vrot.slane %v696, 2
        %v698 = vadd.f32 %v696, %v697
        %v699 = vrot.slane %v698, 1
        %v700 = vadd.f32 %v698, %v699
        %v701 = vadd.f32 %v622, %v623
        %v702 = vadd.f32 %v701, %v624
        %v703 = vadd.f32 %v702, %v625
        %v704 = vadd.f32 %v703, %v626
        %v705 = vadd.f32 %v704, %v627
        %v706 = vadd.f32 %v705, %v628
        %v707 = vadd.f32 %v706, %v629
        %v708 = vrot.slane %v707, 4
        %v709 = vadd.f32 %v707, %v708
        %v710 = vrot.slane %v709, 2
        %v711 = vadd.f32 %v709, %v710
        %v712 = vrot.slane %v711, 1
        %v713 = vadd.f32 %v711, %v712
        %v714 = vadd.f32 %v630, %v631
        %v715 = vadd.f32 %v714, %v632
        %v716 = vadd.f32 %v715, %v633
        %v717 = vadd.f32 %v716, %v634
        %v718 = vadd.f32 %v717, %v635
        %v719 = vadd.f32 %v718, %v636
        %v720 = vadd.f32 %v719, %v637
        %v721 = vrot.slane %v720, 4
        %v722 = vadd.f32 %v720, %v721
        %v723 = vrot.slane %v722, 2
        %v724 = vadd.f32 %v722, %v723
        %v725 = vrot.slane %v724, 1
        %v726 = vadd.f32 %v724, %v725
        %v727 = vadd.f32 %v638, %v639
        %v728 = vadd.f32 %v727, %v640
        %v729 = vadd.f32 %v728, %v641
        %v730 = vadd.f32 %v729, %v642
        %v731 = vadd.f32 %v730, %v643
        %v732 = vadd.f32 %v731, %v644
        %v733 = vadd.f32 %v732, %v645
        %v734 = vrot.slane %v733, 4
        %v735 = vadd.f32 %v733, %v734
        %v736 = vrot.slane %v735, 2
        %v737 = vadd.f32 %v735, %v736
        %v738 = vrot.slane %v737, 1
        %v739 = vadd.f32 %v737, %v738
        %v740 = vadd.f32 %v646, %v647
        %v741 = vadd.f32 %v740, %v648
        %v742 = vadd.f32 %v741, %v649
        %v743 = vadd.f32 %v742, %v650
        %v744 = vadd.f32 %v743, %v651
        %v745 = vadd.f32 %v744, %v652
        %v746 = vadd.f32 %v745, %v653
        %v747 = vrot.slane %v746, 4
        %v748 = vadd.f32 %v746, %v747
        %v749 = vrot.slane %v748, 2
        %v750 = vadd.f32 %v748, %v749
        %v751 = vrot.slane %v750, 1
        %v752 = vadd.f32 %v750, %v751
        %v753 = vadd.f32 %v654, %v655
        %v754 = vadd.f32 %v753, %v656
        %v755 = vadd.f32 %v754, %v657
        %v756 = vadd.f32 %v755, %v658
        %v757 = vadd.f32 %v756, %v659
        %v758 = vadd.f32 %v757, %v660
        %v759 = vadd.f32 %v758, %v661
        %v760 = vrot.slane %v759, 4
        %v761 = vadd.f32 %v759, %v760
        %v762 = vrot.slane %v761, 2
        %v763 = vadd.f32 %v761, %v762
        %v764 = vrot.slane %v763, 1
        %v765 = vadd.f32 %v763, %v764
        %v766 = vld [vmem:[#allocation10] sm:$0xff]
        %v767 = vld [vmem:[#allocation10 + $0x8] sm:$0xff]
        %v768 = vld [vmem:[#allocation10 + $0x10] sm:$0xff]
        %v769 = vld [vmem:[#allocation10 + $0x18] sm:$0xff]
        %v770 = vld [vmem:[#allocation10 + $0x20] sm:$0xff]
        %v771 = vld [vmem:[#allocation10 + $0x28] sm:$0xff]
        %v772 = vld [vmem:[#allocation10 + $0x30] sm:$0xff]
        %v773 = vld [vmem:[#allocation10 + $0x38] sm:$0xff]
        %v774 = vld [vmem:[#allocation10 + $0x40] sm:$0xff]
        %v775 = vld [vmem:[#allocation10 + $0x48] sm:$0xff]
        %v776 = vld [vmem:[#allocation10 + $0x50] sm:$0xff]
        %v777 = vld [vmem:[#allocation10 + $0x58] sm:$0xff]
        %v778 = vld [vmem:[#allocation10 + $0x60] sm:$0xff]
        %v779 = vld [vmem:[#allocation10 + $0x68] sm:$0xff]
        %v780 = vld [vmem:[#allocation10 + $0x70] sm:$0xff]
        %v781 = vld [vmem:[#allocation10 + $0x78] sm:$0xff]
        %v782 = vld [vmem:[%s446] sm:$0xf]
        %v783 = vld [vmem:[%s446 + $0x4] sm:$0xf]
        %v784 = vld [vmem:[%s446 + $0x8] sm:$0xf]
        %v785 = vld [vmem:[%s446 + $0xc] sm:$0xf]
        %v786 = vld [vmem:[%s446 + $0x10] sm:$0xf]
        %v787 = vld [vmem:[%s446 + $0x14] sm:$0xf]
        %v788 = vld [vmem:[%s446 + $0x18] sm:$0xf]
        %v789 = vld [vmem:[%s446 + $0x1c] sm:$0xf]
        %v790 = vld [vmem:[%s446 + $0x20] sm:$0xf]
        %v791 = vld [vmem:[%s446 + $0x24] sm:$0xf]
        %v792 = vld [vmem:[%s446 + $0x28] sm:$0xf]
        %v793 = vld [vmem:[%s446 + $0x2c] sm:$0xf]
        %v794 = vld [vmem:[%s446 + $0x30] sm:$0xf]
        %v795 = vld [vmem:[%s446 + $0x34] sm:$0xf]
        %v796 = vld [vmem:[%s446 + $0x38] sm:$0xf]
        %v797 = vld [vmem:[%s446 + $0x3c] sm:$0xf]
        %v798 = vld [vmem:[%s446 + $0x40] sm:$0xf]
        %v799 = vld [vmem:[%s446 + $0x44] sm:$0xf]
        %v800 = vld [vmem:[%s446 + $0x48] sm:$0xf]
        %v801 = vld [vmem:[%s446 + $0x4c] sm:$0xf]
        %v802 = vld [vmem:[%s446 + $0x50] sm:$0xf]
        %v803 = vld [vmem:[%s446 + $0x54] sm:$0xf]
        %v804 = vld [vmem:[%s446 + $0x58] sm:$0xf]
        %v805 = vld [vmem:[%s446 + $0x5c] sm:$0xf]
        %v806 = vld [vmem:[%s446 + $0x60] sm:$0xf]
        %v807 = vld [vmem:[%s446 + $0x64] sm:$0xf]
        %v808 = vld [vmem:[%s446 + $0x68] sm:$0xf]
        %v809 = vld [vmem:[%s446 + $0x6c] sm:$0xf]
        %v810 = vld [vmem:[%s446 + $0x70] sm:$0xf]
        %v811 = vld [vmem:[%s446 + $0x74] sm:$0xf]
        %v812 = vld [vmem:[%s446 + $0x78] sm:$0xf]
        %v813 = vld [vmem:[%s446 + $0x7c] sm:$0xf]
        %v814 = vld [vmem:[%s446 + $0x80] sm:$0xf]
        %v815 = vld [vmem:[%s446 + $0x84] sm:$0xf]
        %v816 = vld [vmem:[%s446 + $0x88] sm:$0xf]
        %v817 = vld [vmem:[%s446 + $0x8c] sm:$0xf]
        %v818 = vld [vmem:[%s446 + $0x90] sm:$0xf]
        %v819 = vld [vmem:[%s446 + $0x94] sm:$0xf]
        %v820 = vld [vmem:[%s446 + $0x98] sm:$0xf]
        %v821 = vld [vmem:[%s446 + $0x9c] sm:$0xf]
        %v822 = vld [vmem:[%s446 + $0xa0] sm:$0xf]
        %v823 = vld [vmem:[%s446 + $0xa4] sm:$0xf]
        %v824 = vld [vmem:[%s446 + $0xa8] sm:$0xf]
        %v825 = vld [vmem:[%s446 + $0xac] sm:$0xf]
        %v826 = vld [vmem:[%s446 + $0xb0] sm:$0xf]
        %v827 = vld [vmem:[%s446 + $0xb4] sm:$0xf]
        %v828 = vld [vmem:[%s446 + $0xb8] sm:$0xf]
        %v829 = vld [vmem:[%s446 + $0xbc] sm:$0xf]
        %v830 = vld [vmem:[%s446 + $0xc0] sm:$0xf]
        %v831 = vld [vmem:[%s446 + $0xc4] sm:$0xf]
        %v832 = vld [vmem:[%s446 + $0xc8] sm:$0xf]
        %v833 = vld [vmem:[%s446 + $0xcc] sm:$0xf]
        %v834 = vld [vmem:[%s446 + $0xd0] sm:$0xf]
        %v835 = vld [vmem:[%s446 + $0xd4] sm:$0xf]
        %v836 = vld [vmem:[%s446 + $0xd8] sm:$0xf]
        %v837 = vld [vmem:[%s446 + $0xdc] sm:$0xf]
        %v838 = vld [vmem:[%s446 + $0xe0] sm:$0xf]
        %v839 = vld [vmem:[%s446 + $0xe4] sm:$0xf]
        %v840 = vld [vmem:[%s446 + $0xe8] sm:$0xf]
        %v841 = vld [vmem:[%s446 + $0xec] sm:$0xf]
        %v842 = vld [vmem:[%s446 + $0xf0] sm:$0xf]
        %v843 = vld [vmem:[%s446 + $0xf4] sm:$0xf]
        %v844 = vld [vmem:[%s446 + $0xf8] sm:$0xf]
        %v845 = vld [vmem:[%s446 + $0xfc] sm:$0xf]
        %v846 = vunpack.c.l.bf16 %v782
        %v847 = vunpack.c.l.bf16 %v783
        %v848 = vunpack.c.l.bf16 %v784
        %v849 = vunpack.c.l.bf16 %v785
        %v850 = vunpack.c.l.bf16 %v786
        %v851 = vunpack.c.l.bf16 %v787
        %v852 = vunpack.c.l.bf16 %v788
        %v853 = vunpack.c.l.bf16 %v789
        %v854 = vunpack.c.l.bf16 %v790
        %v855 = vunpack.c.l.bf16 %v791
        %v856 = vunpack.c.l.bf16 %v792
        %v857 = vunpack.c.l.bf16 %v793
        %v858 = vunpack.c.l.bf16 %v794
        %v859 = vunpack.c.l.bf16 %v795
        %v860 = vunpack.c.l.bf16 %v796
        %v861 = vunpack.c.l.bf16 %v797
        %v862 = vunpack.c.l.bf16 %v798
        %v863 = vunpack.c.l.bf16 %v799
        %v864 = vunpack.c.l.bf16 %v800
        %v865 = vunpack.c.l.bf16 %v801
        %v866 = vunpack.c.l.bf16 %v802
        %v867 = vunpack.c.l.bf16 %v803
        %v868 = vunpack.c.l.bf16 %v804
        %v869 = vunpack.c.l.bf16 %v805
        %v870 = vunpack.c.l.bf16 %v806
        %v871 = vunpack.c.l.bf16 %v807
        %v872 = vunpack.c.l.bf16 %v808
        %v873 = vunpack.c.l.bf16 %v809
        %v874 = vunpack.c.l.bf16 %v810
        %v875 = vunpack.c.l.bf16 %v811
        %v876 = vunpack.c.l.bf16 %v812
        %v877 = vunpack.c.l.bf16 %v813
        %v878 = vunpack.c.l.bf16 %v814
        %v879 = vunpack.c.l.bf16 %v815
        %v880 = vunpack.c.l.bf16 %v816
        %v881 = vunpack.c.l.bf16 %v817
        %v882 = vunpack.c.l.bf16 %v818
        %v883 = vunpack.c.l.bf16 %v819
        %v884 = vunpack.c.l.bf16 %v820
        %v885 = vunpack.c.l.bf16 %v821
        %v886 = vunpack.c.l.bf16 %v822
        %v887 = vunpack.c.l.bf16 %v823
        %v888 = vunpack.c.l.bf16 %v824
        %v889 = vunpack.c.l.bf16 %v825
        %v890 = vunpack.c.l.bf16 %v826
        %v891 = vunpack.c.l.bf16 %v827
        %v892 = vunpack.c.l.bf16 %v828
        %v893 = vunpack.c.l.bf16 %v829
        %v894 = vunpack.c.l.bf16 %v830
        %v895 = vunpack.c.l.bf16 %v831
        %v896 = vunpack.c.l.bf16 %v832
        %v897 = vunpack.c.l.bf16 %v833
        %v898 = vunpack.c.l.bf16 %v834
        %v899 = vunpack.c.l.bf16 %v835
        %v900 = vunpack.c.l.bf16 %v836
        %v901 = vunpack.c.l.bf16 %v837
        %v902 = vunpack.c.l.bf16 %v838
        %v903 = vunpack.c.l.bf16 %v839
        %v904 = vunpack.c.l.bf16 %v840
        %v905 = vunpack.c.l.bf16 %v841
        %v906 = vunpack.c.l.bf16 %v842
        %v907 = vunpack.c.l.bf16 %v843
        %v908 = vunpack.c.l.bf16 %v844
        %v909 = vunpack.c.l.bf16 %v845
        %v910 = vadd.f32 %v846, %v847
        %v911 = vadd.f32 %v910, %v848
        %v912 = vadd.f32 %v911, %v849
        %v913 = vadd.f32 %v912, %v850
        %v914 = vadd.f32 %v913, %v851
        %v915 = vadd.f32 %v914, %v852
        %v916 = vadd.f32 %v915, %v853
        %v917 = vrot.slane %v916, 4
        %v918 = vadd.f32 %v916, %v917
        %v919 = vrot.slane %v918, 2
        %v920 = vadd.f32 %v918, %v919
        %v921 = vrot.slane %v920, 1
        %v922 = vadd.f32 %v920, %v921
        %v923 = vadd.f32 %v854, %v855
        %v924 = vadd.f32 %v923, %v856
        %v925 = vadd.f32 %v924, %v857
        %v926 = vadd.f32 %v925, %v858
        %v927 = vadd.f32 %v926, %v859
        %v928 = vadd.f32 %v927, %v860
        %v929 = vadd.f32 %v928, %v861
        %v930 = vrot.slane %v929, 4
        %v931 = vadd.f32 %v929, %v930
        %v932 = vrot.slane %v931, 2
        %v933 = vadd.f32 %v931, %v932
        %v934 = vrot.slane %v933, 1
        %v935 = vadd.f32 %v933, %v934
        %v936 = vadd.f32 %v862, %v863
        %v937 = vadd.f32 %v936, %v864
        %v938 = vadd.f32 %v937, %v865
        %v939 = vadd.f32 %v938, %v866
        %v940 = vadd.f32 %v939, %v867
        %v941 = vadd.f32 %v940, %v868
        %v942 = vadd.f32 %v941, %v869
        %v943 = vrot.slane %v942, 4
        %v944 = vadd.f32 %v942, %v943
        %v945 = vrot.slane %v944, 2
        %v946 = vadd.f32 %v944, %v945
        %v947 = vrot.slane %v946, 1
        %v948 = vadd.f32 %v946, %v947
        %v949 = vadd.f32 %v870, %v871
        %v950 = vadd.f32 %v949, %v872
        %v951 = vadd.f32 %v950, %v873
        %v952 = vadd.f32 %v951, %v874
        %v953 = vadd.f32 %v952, %v875
        %v954 = vadd.f32 %v953, %v876
        %v955 = vadd.f32 %v954, %v877
        %v956 = vrot.slane %v955, 4
        %v957 = vadd.f32 %v955, %v956
        %v958 = vrot.slane %v957, 2
        %v959 = vadd.f32 %v957, %v958
        %v960 = vrot.slane %v959, 1
        %v961 = vadd.f32 %v959, %v960
        %v962 = vadd.f32 %v878, %v879
        %v963 = vadd.f32 %v962, %v880
        %v964 = vadd.f32 %v963, %v881
        %v965 = vadd.f32 %v964, %v882
        %v966 = vadd.f32 %v965, %v883
        %v967 = vadd.f32 %v966, %v884
        %v968 = vadd.f32 %v967, %v885
        %v969 = vrot.slane %v968, 4
        %v970 = vadd.f32 %v968, %v969
        %v971 = vrot.slane %v970, 2
        %v972 = vadd.f32 %v970, %v971
        %v973 = vrot.slane %v972, 1
        %v974 = vadd.f32 %v972, %v973
        %v975 = vadd.f32 %v886, %v887
        %v976 = vadd.f32 %v975, %v888
        %v977 = vadd.f32 %v976, %v889
        %v978 = vadd.f32 %v977, %v890
        %v979 = vadd.f32 %v978, %v891
        %v980 = vadd.f32 %v979, %v892
        %v981 = vadd.f32 %v980, %v893
        %v982 = vrot.slane %v981, 4
        %v983 = vadd.f32 %v981, %v982
        %v984 = vrot.slane %v983, 2
        %v985 = vadd.f32 %v983, %v984
        %v986 = vrot.slane %v985, 1
        %v987 = vadd.f32 %v985, %v986
        %v988 = vadd.f32 %v894, %v895
        %v989 = vadd.f32 %v988, %v896
        %v990 = vadd.f32 %v989, %v897
        %v991 = vadd.f32 %v990, %v898
        %v992 = vadd.f32 %v991, %v899
        %v993 = vadd.f32 %v992, %v900
        %v994 = vadd.f32 %v993, %v901
        %v995 = vrot.slane %v994, 4
        %v996 = vadd.f32 %v994, %v995
        %v997 = vrot.slane %v996, 2
        %v998 = vadd.f32 %v996, %v997
        %v999 = vrot.slane %v998, 1
        %v1000 = vadd.f32 %v998, %v999
        %v1001 = vadd.f32 %v902, %v903
        %v1002 = vadd.f32 %v1001, %v904
        %v1003 = vadd.f32 %v1002, %v905
        %v1004 = vadd.f32 %v1003, %v906
        %v1005 = vadd.f32 %v1004, %v907
        %v1006 = vadd.f32 %v1005, %v908
        %v1007 = vadd.f32 %v1006, %v909
        %v1008 = vrot.slane %v1007, 4
        %v1009 = vadd.f32 %v1007, %v1008
        %v1010 = vrot.slane %v1009, 2
        %v1011 = vadd.f32 %v1009, %v1010
        %v1012 = vrot.slane %v1011, 1
        %v1013 = vadd.f32 %v1011, %v1012
        %v1014 = vld [vmem:[#allocation11] sm:$0xff]
        %v1015 = vld [vmem:[#allocation11 + $0x8] sm:$0xff]
        %v1016 = vld [vmem:[#allocation11 + $0x10] sm:$0xff]
        %v1017 = vld [vmem:[#allocation11 + $0x18] sm:$0xff]
        %v1018 = vld [vmem:[#allocation11 + $0x20] sm:$0xff]
        %v1019 = vld [vmem:[#allocation11 + $0x28] sm:$0xff]
        %v1020 = vld [vmem:[#allocation11 + $0x30] sm:$0xff]
        %v1021 = vld [vmem:[#allocation11 + $0x38] sm:$0xff]
        %v1022 = vld [vmem:[#allocation11 + $0x40] sm:$0xff]
        %v1023 = vld [vmem:[#allocation11 + $0x48] sm:$0xff]
        %v1024 = vld [vmem:[#allocation11 + $0x50] sm:$0xff]
        %v1025 = vld [vmem:[#allocation11 + $0x58] sm:$0xff]
        %v1026 = vld [vmem:[#allocation11 + $0x60] sm:$0xff]
        %v1027 = vld [vmem:[#allocation11 + $0x68] sm:$0xff]
        %v1028 = vld [vmem:[#allocation11 + $0x70] sm:$0xff]
        %v1029 = vld [vmem:[#allocation11 + $0x78] sm:$0xff]
        %vm1038 = vcmask 1041409
        %v1039 = vsel %vm1038, %v935, %v922
        %vm1040 = vcmask 1042434
        %v1041 = vsel %vm1040, %v948, %v1039
        %vm1042 = vcmask 1043459
        %v1043 = vsel %vm1042, %v961, %v1041
        %vm1044 = vcmask 1044484
        %v1045 = vsel %vm1044, %v974, %v1043
        %vm1046 = vcmask 1045509
        %v1047 = vsel %vm1046, %v987, %v1045
        %vm1048 = vcmask 1046534
        %v1049 = vsel %vm1048, %v1000, %v1047
        %vm1050 = vcmask 1047559
        %v1051 = vsel %vm1050, %v1013, %v1049
        %1053 = vmatprep.subr.mxu0 0.0
        %1054 = vmatpush1.msra.mxu0 %v1014
        %1055 = vmatprep.subr.mxu0 0.0
        %1056 = vmatpush1.msra.mxu0 %v1015
        %1057 = vmatprep.subr.mxu0 0.0
        %1058 = vmatpush1.msra.mxu0 %v1016
        %1059 = vmatprep.subr.mxu0 0.0
        %1060 = vmatpush1.msra.mxu0 %v1017
        %1061 = vmatprep.subr.mxu0 0.0
        %1062 = vmatpush1.msra.mxu0 %v1018
        %1063 = vmatprep.subr.mxu0 0.0
        %1064 = vmatpush1.msra.mxu0 %v1019
        %1065 = vmatprep.subr.mxu0 0.0
        %1066 = vmatpush1.msra.mxu0 %v1020
        %1067 = vmatprep.subr.mxu0 0.0
        %1068 = vmatpush1.msra.mxu0 %v1021
        %1069 = vmatprep.subr.mxu0 0.0
        %1070 = vmatpush1.msra.mxu0 %v1022
        %1071 = vmatprep.subr.mxu0 0.0
        %1072 = vmatpush1.msra.mxu0 %v1023
        %1073 = vmatprep.subr.mxu0 0.0
        %1074 = vmatpush1.msra.mxu0 %v1024
        %1075 = vmatprep.subr.mxu0 0.0
        %1076 = vmatpush1.msra.mxu0 %v1025
        %1077 = vmatprep.subr.mxu0 0.0
        %1078 = vmatpush1.msra.mxu0 %v1026
        %1079 = vmatprep.subr.mxu0 0.0
        %1080 = vmatpush1.msra.mxu0 %v1027
        %1081 = vmatprep.subr.mxu0 0.0
        %1082 = vmatpush1.msra.mxu0 %v1028
        %1083 = vmatprep.subr.mxu0 0.0
        %1084 = vmatpush1.msra.mxu0 %v1029
        %1085 = vmatprep.subr.mxu0 0.0
        %1086 = vmatpush1.msra.mxu0 0.0
        %1087 = vmatprep.subr.mxu0 0.0
        %1088 = vmatpush1.msra.mxu0 0.0
        %1089 = vmatprep.subr.mxu0 0.0
        %1090 = vmatpush1.msra.mxu0 0.0
        %1091 = vmatprep.subr.mxu0 0.0
        %1092 = vmatpush1.msra.mxu0 0.0
        %1093 = vmatprep.subr.mxu0 0.0
        %1094 = vmatpush1.msra.mxu0 0.0
        %1095 = vmatprep.subr.mxu0 0.0
        %1096 = vmatpush1.msra.mxu0 0.0
        %1097 = vmatprep.subr.mxu0 0.0
        %1098 = vmatpush1.msra.mxu0 0.0
        %1099 = vmatprep.subr.mxu0 0.0
        %1100 = vmatpush1.msra.mxu0 0.0
        %1101 = vmatprep.subr.mxu0 0.0
        %1102 = vmatpush1.msra.mxu0 0.0
        %1103 = vmatprep.subr.mxu0 0.0
        %1104 = vmatpush1.msra.mxu0 0.0
        %1105 = vmatprep.subr.mxu0 0.0
        %1106 = vmatpush1.msra.mxu0 0.0
        %1107 = vmatprep.subr.mxu0 0.0
        %1108 = vmatpush1.msra.mxu0 0.0
        %1109 = vmatprep.subr.mxu0 0.0
        %1110 = vmatpush1.msra.mxu0 0.0
        %1111 = vmatprep.subr.mxu0 0.0
        %1112 = vmatpush1.msra.mxu0 0.0
        %1113 = vmatprep.subr.mxu0 0.0
        %1114 = vmatpush1.msra.mxu0 0.0
        %1115 = vmatprep.subr.mxu0 0.0
        %1116 = vmatpush1.msra.mxu0 0.0
        %1117 = vmatprep.mubr.f32.mxu0 0.0
        %1118 = vmatmul.mubr.f32.gmra.mrb[0].mxu0 %v1051
        %v1119 = vpop.f32.mrb[0].mxu0
        %v1120 = vadd.f32 0.0, %v1119
        %v1121 = vpop.f32.mrb[0].mxu0
        %1122 = vdwg.mxu0
        %v1131 = vsel %vm1038, %v687, %v674
        %v1132 = vsel %vm1040, %v700, %v1131
        %v1133 = vsel %vm1042, %v713, %v1132
        %v1134 = vsel %vm1044, %v726, %v1133
        %v1135 = vsel %vm1046, %v739, %v1134
        %v1136 = vsel %vm1048, %v752, %v1135
        %v1137 = vsel %vm1050, %v765, %v1136
        %1139 = vmatprep.subr.mxu0 0.0
        %1140 = vmatpush1.msra.mxu0 %v766
        %1141 = vmatprep.subr.mxu0 0.0
        %1142 = vmatpush1.msra.mxu0 %v767
        %1143 = vmatprep.subr.mxu0 0.0
        %1144 = vmatpush1.msra.mxu0 %v768
        %1145 = vmatprep.subr.mxu0 0.0
        %1146 = vmatpush1.msra.mxu0 %v769
        %1147 = vmatprep.subr.mxu0 0.0
        %1148 = vmatpush1.msra.mxu0 %v770
        %1149 = vmatprep.subr.mxu0 0.0
        %1150 = vmatpush1.msra.mxu0 %v771
        %1151 = vmatprep.subr.mxu0 0.0
        %1152 = vmatpush1.msra.mxu0 %v772
        %1153 = vmatprep.subr.mxu0 0.0
        %1154 = vmatpush1.msra.mxu0 %v773
        %1155 = vmatprep.subr.mxu0 0.0
        %1156 = vmatpush1.msra.mxu0 %v774
        %1157 = vmatprep.subr.mxu0 0.0
        %1158 = vmatpush1.msra.mxu0 %v775
        %1159 = vmatprep.subr.mxu0 0.0
        %1160 = vmatpush1.msra.mxu0 %v776
        %1161 = vmatprep.subr.mxu0 0.0
        %1162 = vmatpush1.msra.mxu0 %v777
        %1163 = vmatprep.subr.mxu0 0.0
        %1164 = vmatpush1.msra.mxu0 %v778
        %1165 = vmatprep.subr.mxu0 0.0
        %1166 = vmatpush1.msra.mxu0 %v779
        %1167 = vmatprep.subr.mxu0 0.0
        %1168 = vmatpush1.msra.mxu0 %v780
        %1169 = vmatprep.subr.mxu0 0.0
        %1170 = vmatpush1.msra.mxu0 %v781
        %1171 = vmatprep.subr.mxu0 0.0
        %1172 = vmatpush1.msra.mxu0 0.0
        %1173 = vmatprep.subr.mxu0 0.0
        %1174 = vmatpush1.msra.mxu0 0.0
        %1175 = vmatprep.subr.mxu0 0.0
        %1176 = vmatpush1.msra.mxu0 0.0
        %1177 = vmatprep.subr.mxu0 0.0
        %1178 = vmatpush1.msra.mxu0 0.0
        %1179 = vmatprep.subr.mxu0 0.0
        %1180 = vmatpush1.msra.mxu0 0.0
        %1181 = vmatprep.subr.mxu0 0.0
        %1182 = vmatpush1.msra.mxu0 0.0
        %1183 = vmatprep.subr.mxu0 0.0
        %1184 = vmatpush1.msra.mxu0 0.0
        %1185 = vmatprep.subr.mxu0 0.0
        %1186 = vmatpush1.msra.mxu0 0.0
        %1187 = vmatprep.subr.mxu0 0.0
        %1188 = vmatpush1.msra.mxu0 0.0
        %1189 = vmatprep.subr.mxu0 0.0
        %1190 = vmatpush1.msra.mxu0 0.0
        %1191 = vmatprep.subr.mxu0 0.0
        %1192 = vmatpush1.msra.mxu0 0.0
        %1193 = vmatprep.subr.mxu0 0.0
        %1194 = vmatpush1.msra.mxu0 0.0
        %1195 = vmatprep.subr.mxu0 0.0
        %1196 = vmatpush1.msra.mxu0 0.0
        %1197 = vmatprep.subr.mxu0 0.0
        %1198 = vmatpush1.msra.mxu0 0.0
        %1199 = vmatprep.subr.mxu0 0.0
        %1200 = vmatpush1.msra.mxu0 0.0
        %1201 = vmatprep.subr.mxu0 0.0
        %1202 = vmatpush1.msra.mxu0 0.0
        %1203 = vmatprep.mubr.f32.mxu0 0.0
        %1204 = vmatmul.mubr.f32.gmra.mrb[0].mxu0 %v1137
        %v1205 = vpop.f32.mrb[0].mxu0
        %v1206 = vadd.f32 %v1120, %v1205
        %v1207 = vpop.f32.mrb[0].mxu0
        %1208 = vdwg.mxu0
        %v1209 = vld [vmem:[%s455] sm:$0xf]
        %v1210 = vld [vmem:[%s455 + $0x4] sm:$0xf]
        %v1211 = vld [vmem:[%s455 + $0x8] sm:$0xf]
        %v1212 = vld [vmem:[%s455 + $0xc] sm:$0xf]
        %v1213 = vld [vmem:[%s455 + $0x10] sm:$0xf]
        %v1214 = vld [vmem:[%s455 + $0x14] sm:$0xf]
        %v1215 = vld [vmem:[%s455 + $0x18] sm:$0xf]
        %v1216 = vld [vmem:[%s455 + $0x1c] sm:$0xf]
        %v1217 = vld [vmem:[%s455 + $0x20] sm:$0xf]
        %v1218 = vld [vmem:[%s455 + $0x24] sm:$0xf]
        %v1219 = vld [vmem:[%s455 + $0x28] sm:$0xf]
        %v1220 = vld [vmem:[%s455 + $0x2c] sm:$0xf]
        %v1221 = vld [vmem:[%s455 + $0x30] sm:$0xf]
        %v1222 = vld [vmem:[%s455 + $0x34] sm:$0xf]
        %v1223 = vld [vmem:[%s455 + $0x38] sm:$0xf]
        %v1224 = vld [vmem:[%s455 + $0x3c] sm:$0xf]
        %v1225 = vld [vmem:[%s455 + $0x40] sm:$0xf]
        %v1226 = vld [vmem:[%s455 + $0x44] sm:$0xf]
        %v1227 = vld [vmem:[%s455 + $0x48] sm:$0xf]
        %v1228 = vld [vmem:[%s455 + $0x4c] sm:$0xf]
        %v1229 = vld [vmem:[%s455 + $0x50] sm:$0xf]
        %v1230 = vld [vmem:[%s455 + $0x54] sm:$0xf]
        %v1231 = vld [vmem:[%s455 + $0x58] sm:$0xf]
        %v1232 = vld [vmem:[%s455 + $0x5c] sm:$0xf]
        %v1233 = vld [vmem:[%s455 + $0x60] sm:$0xf]
        %v1234 = vld [vmem:[%s455 + $0x64] sm:$0xf]
        %v1235 = vld [vmem:[%s455 + $0x68] sm:$0xf]
        %v1236 = vld [vmem:[%s455 + $0x6c] sm:$0xf]
        %v1237 = vld [vmem:[%s455 + $0x70] sm:$0xf]
        %v1238 = vld [vmem:[%s455 + $0x74] sm:$0xf]
        %v1239 = vld [vmem:[%s455 + $0x78] sm:$0xf]
        %v1240 = vld [vmem:[%s455 + $0x7c] sm:$0xf]
        %v1241 = vld [vmem:[%s455 + $0x80] sm:$0xf]
        %v1242 = vld [vmem:[%s455 + $0x84] sm:$0xf]
        %v1243 = vld [vmem:[%s455 + $0x88] sm:$0xf]
        %v1244 = vld [vmem:[%s455 + $0x8c] sm:$0xf]
        %v1245 = vld [vmem:[%s455 + $0x90] sm:$0xf]
        %v1246 = vld [vmem:[%s455 + $0x94] sm:$0xf]
        %v1247 = vld [vmem:[%s455 + $0x98] sm:$0xf]
        %v1248 = vld [vmem:[%s455 + $0x9c] sm:$0xf]
        %v1249 = vld [vmem:[%s455 + $0xa0] sm:$0xf]
        %v1250 = vld [vmem:[%s455 + $0xa4] sm:$0xf]
        %v1251 = vld [vmem:[%s455 + $0xa8] sm:$0xf]
        %v1252 = vld [vmem:[%s455 + $0xac] sm:$0xf]
        %v1253 = vld [vmem:[%s455 + $0xb0] sm:$0xf]
        %v1254 = vld [vmem:[%s455 + $0xb4] sm:$0xf]
        %v1255 = vld [vmem:[%s455 + $0xb8] sm:$0xf]
        %v1256 = vld [vmem:[%s455 + $0xbc] sm:$0xf]
        %v1257 = vld [vmem:[%s455 + $0xc0] sm:$0xf]
        %v1258 = vld [vmem:[%s455 + $0xc4] sm:$0xf]
        %v1259 = vld [vmem:[%s455 + $0xc8] sm:$0xf]
        %v1260 = vld [vmem:[%s455 + $0xcc] sm:$0xf]
        %v1261 = vld [vmem:[%s455 + $0xd0] sm:$0xf]
        %v1262 = vld [vmem:[%s455 + $0xd4] sm:$0xf]
        %v1263 = vld [vmem:[%s455 + $0xd8] sm:$0xf]
        %v1264 = vld [vmem:[%s455 + $0xdc] sm:$0xf]
        %v1265 = vld [vmem:[%s455 + $0xe0] sm:$0xf]
        %v1266 = vld [vmem:[%s455 + $0xe4] sm:$0xf]
        %v1267 = vld [vmem:[%s455 + $0xe8] sm:$0xf]
        %v1268 = vld [vmem:[%s455 + $0xec] sm:$0xf]
        %v1269 = vld [vmem:[%s455 + $0xf0] sm:$0xf]
        %v1270 = vld [vmem:[%s455 + $0xf4] sm:$0xf]
        %v1271 = vld [vmem:[%s455 + $0xf8] sm:$0xf]
        %v1272 = vld [vmem:[%s455 + $0xfc] sm:$0xf]
        %v1273 = vunpack.c.l.bf16 %v1209
        %v1274 = vunpack.c.l.bf16 %v1210
        %v1275 = vunpack.c.l.bf16 %v1211
        %v1276 = vunpack.c.l.bf16 %v1212
        %v1277 = vunpack.c.l.bf16 %v1213
        %v1278 = vunpack.c.l.bf16 %v1214
        %v1279 = vunpack.c.l.bf16 %v1215
        %v1280 = vunpack.c.l.bf16 %v1216
        %v1281 = vunpack.c.l.bf16 %v1217
        %v1282 = vunpack.c.l.bf16 %v1218
        %v1283 = vunpack.c.l.bf16 %v1219
        %v1284 = vunpack.c.l.bf16 %v1220
        %v1285 = vunpack.c.l.bf16 %v1221
        %v1286 = vunpack.c.l.bf16 %v1222
        %v1287 = vunpack.c.l.bf16 %v1223
        %v1288 = vunpack.c.l.bf16 %v1224
        %v1289 = vunpack.c.l.bf16 %v1225
        %v1290 = vunpack.c.l.bf16 %v1226
        %v1291 = vunpack.c.l.bf16 %v1227
        %v1292 = vunpack.c.l.bf16 %v1228
        %v1293 = vunpack.c.l.bf16 %v1229
        %v1294 = vunpack.c.l.bf16 %v1230
        %v1295 = vunpack.c.l.bf16 %v1231
        %v1296 = vunpack.c.l.bf16 %v1232
        %v1297 = vunpack.c.l.bf16 %v1233
        %v1298 = vunpack.c.l.bf16 %v1234
        %v1299 = vunpack.c.l.bf16 %v1235
        %v1300 = vunpack.c.l.bf16 %v1236
        %v1301 = vunpack.c.l.bf16 %v1237
        %v1302 = vunpack.c.l.bf16 %v1238
        %v1303 = vunpack.c.l.bf16 %v1239
        %v1304 = vunpack.c.l.bf16 %v1240
        %v1305 = vunpack.c.l.bf16 %v1241
        %v1306 = vunpack.c.l.bf16 %v1242
        %v1307 = vunpack.c.l.bf16 %v1243
        %v1308 = vunpack.c.l.bf16 %v1244
        %v1309 = vunpack.c.l.bf16 %v1245
        %v1310 = vunpack.c.l.bf16 %v1246
        %v1311 = vunpack.c.l.bf16 %v1247
        %v1312 = vunpack.c.l.bf16 %v1248
        %v1313 = vunpack.c.l.bf16 %v1249
        %v1314 = vunpack.c.l.bf16 %v1250
        %v1315 = vunpack.c.l.bf16 %v1251
        %v1316 = vunpack.c.l.bf16 %v1252
        %v1317 = vunpack.c.l.bf16 %v1253
        %v1318 = vunpack.c.l.bf16 %v1254
        %v1319 = vunpack.c.l.bf16 %v1255
        %v1320 = vunpack.c.l.bf16 %v1256
        %v1321 = vunpack.c.l.bf16 %v1257
        %v1322 = vunpack.c.l.bf16 %v1258
        %v1323 = vunpack.c.l.bf16 %v1259
        %v1324 = vunpack.c.l.bf16 %v1260
        %v1325 = vunpack.c.l.bf16 %v1261
        %v1326 = vunpack.c.l.bf16 %v1262
        %v1327 = vunpack.c.l.bf16 %v1263
        %v1328 = vunpack.c.l.bf16 %v1264
        %v1329 = vunpack.c.l.bf16 %v1265
        %v1330 = vunpack.c.l.bf16 %v1266
        %v1331 = vunpack.c.l.bf16 %v1267
        %v1332 = vunpack.c.l.bf16 %v1268
        %v1333 = vunpack.c.l.bf16 %v1269
        %v1334 = vunpack.c.l.bf16 %v1270
        %v1335 = vunpack.c.l.bf16 %v1271
        %v1336 = vunpack.c.l.bf16 %v1272
        %v1337 = vadd.f32 %v1273, %v1274
        %v1338 = vadd.f32 %v1337, %v1275
        %v1339 = vadd.f32 %v1338, %v1276
        %v1340 = vadd.f32 %v1339, %v1277
        %v1341 = vadd.f32 %v1340, %v1278
        %v1342 = vadd.f32 %v1341, %v1279
        %v1343 = vadd.f32 %v1342, %v1280
        %v1344 = vrot.slane %v1343, 4
        %v1345 = vadd.f32 %v1343, %v1344
        %v1346 = vrot.slane %v1345, 2
        %v1347 = vadd.f32 %v1345, %v1346
        %v1348 = vrot.slane %v1347, 1
        %v1349 = vadd.f32 %v1347, %v1348
        %v1350 = vadd.f32 %v1281, %v1282
        %v1351 = vadd.f32 %v1350, %v1283
        %v1352 = vadd.f32 %v1351, %v1284
        %v1353 = vadd.f32 %v1352, %v1285
        %v1354 = vadd.f32 %v1353, %v1286
        %v1355 = vadd.f32 %v1354, %v1287
        %v1356 = vadd.f32 %v1355, %v1288
        %v1357 = vrot.slane %v1356, 4
        %v1358 = vadd.f32 %v1356, %v1357
        %v1359 = vrot.slane %v1358, 2
        %v1360 = vadd.f32 %v1358, %v1359
        %v1361 = vrot.slane %v1360, 1
        %v1362 = vadd.f32 %v1360, %v1361
        %v1363 = vadd.f32 %v1289, %v1290
        %v1364 = vadd.f32 %v1363, %v1291
        %v1365 = vadd.f32 %v1364, %v1292
        %v1366 = vadd.f32 %v1365, %v1293
        %v1367 = vadd.f32 %v1366, %v1294
        %v1368 = vadd.f32 %v1367, %v1295
        %v1369 = vadd.f32 %v1368, %v1296
        %v1370 = vrot.slane %v1369, 4
        %v1371 = vadd.f32 %v1369, %v1370
        %v1372 = vrot.slane %v1371, 2
        %v1373 = vadd.f32 %v1371, %v1372
        %v1374 = vrot.slane %v1373, 1
        %v1375 = vadd.f32 %v1373, %v1374
        %v1376 = vadd.f32 %v1297, %v1298
        %v1377 = vadd.f32 %v1376, %v1299
        %v1378 = vadd.f32 %v1377, %v1300
        %v1379 = vadd.f32 %v1378, %v1301
        %v1380 = vadd.f32 %v1379, %v1302
        %v1381 = vadd.f32 %v1380, %v1303
        %v1382 = vadd.f32 %v1381, %v1304
        %v1383 = vrot.slane %v1382, 4
        %v1384 = vadd.f32 %v1382, %v1383
        %v1385 = vrot.slane %v1384, 2
        %v1386 = vadd.f32 %v1384, %v1385
        %v1387 = vrot.slane %v1386, 1
        %v1388 = vadd.f32 %v1386, %v1387
        %v1389 = vadd.f32 %v1305, %v1306
        %v1390 = vadd.f32 %v1389, %v1307
        %v1391 = vadd.f32 %v1390, %v1308
        %v1392 = vadd.f32 %v1391, %v1309
        %v1393 = vadd.f32 %v1392, %v1310
        %v1394 = vadd.f32 %v1393, %v1311
        %v1395 = vadd.f32 %v1394, %v1312
        %v1396 = vrot.slane %v1395, 4
        %v1397 = vadd.f32 %v1395, %v1396
        %v1398 = vrot.slane %v1397, 2
        %v1399 = vadd.f32 %v1397, %v1398
        %v1400 = vrot.slane %v1399, 1
        %v1401 = vadd.f32 %v1399, %v1400
        %v1402 = vadd.f32 %v1313, %v1314
        %v1403 = vadd.f32 %v1402, %v1315
        %v1404 = vadd.f32 %v1403, %v1316
        %v1405 = vadd.f32 %v1404, %v1317
        %v1406 = vadd.f32 %v1405, %v1318
        %v1407 = vadd.f32 %v1406, %v1319
        %v1408 = vadd.f32 %v1407, %v1320
        %v1409 = vrot.slane %v1408, 4
        %v1410 = vadd.f32 %v1408, %v1409
        %v1411 = vrot.slane %v1410, 2
        %v1412 = vadd.f32 %v1410, %v1411
        %v1413 = vrot.slane %v1412, 1
        %v1414 = vadd.f32 %v1412, %v1413
        %v1415 = vadd.f32 %v1321, %v1322
        %v1416 = vadd.f32 %v1415, %v1323
        %v1417 = vadd.f32 %v1416, %v1324
        %v1418 = vadd.f32 %v1417, %v1325
        %v1419 = vadd.f32 %v1418, %v1326
        %v1420 = vadd.f32 %v1419, %v1327
        %v1421 = vadd.f32 %v1420, %v1328
        %v1422 = vrot.slane %v1421, 4
        %v1423 = vadd.f32 %v1421, %v1422
        %v1424 = vrot.slane %v1423, 2
        %v1425 = vadd.f32 %v1423, %v1424
        %v1426 = vrot.slane %v1425, 1
        %v1427 = vadd.f32 %v1425, %v1426
        %v1428 = vadd.f32 %v1329, %v1330
        %v1429 = vadd.f32 %v1428, %v1331
        %v1430 = vadd.f32 %v1429, %v1332
        %v1431 = vadd.f32 %v1430, %v1333
        %v1432 = vadd.f32 %v1431, %v1334
        %v1433 = vadd.f32 %v1432, %v1335
        %v1434 = vadd.f32 %v1433, %v1336
        %v1435 = vrot.slane %v1434, 4
        %v1436 = vadd.f32 %v1434, %v1435
        %v1437 = vrot.slane %v1436, 2
        %v1438 = vadd.f32 %v1436, %v1437
        %v1439 = vrot.slane %v1438, 1
        %v1440 = vadd.f32 %v1438, %v1439
        %v1441 = vld [vmem:[#allocation13] sm:$0xff]
        %v1442 = vld [vmem:[#allocation13 + $0x8] sm:$0xff]
        %v1443 = vld [vmem:[#allocation13 + $0x10] sm:$0xff]
        %v1444 = vld [vmem:[#allocation13 + $0x18] sm:$0xff]
        %v1445 = vld [vmem:[#allocation13 + $0x20] sm:$0xff]
        %v1446 = vld [vmem:[#allocation13 + $0x28] sm:$0xff]
        %v1447 = vld [vmem:[#allocation13 + $0x30] sm:$0xff]
        %v1448 = vld [vmem:[#allocation13 + $0x38] sm:$0xff]
        %v1449 = vld [vmem:[#allocation13 + $0x40] sm:$0xff]
        %v1450 = vld [vmem:[#allocation13 + $0x48] sm:$0xff]
        %v1451 = vld [vmem:[#allocation13 + $0x50] sm:$0xff]
        %v1452 = vld [vmem:[#allocation13 + $0x58] sm:$0xff]
        %v1453 = vld [vmem:[#allocation13 + $0x60] sm:$0xff]
        %v1454 = vld [vmem:[#allocation13 + $0x68] sm:$0xff]
        %v1455 = vld [vmem:[#allocation13 + $0x70] sm:$0xff]
        %v1456 = vld [vmem:[#allocation13 + $0x78] sm:$0xff]
        %v1465 = vsel %vm1038, %v1362, %v1349
        %v1466 = vsel %vm1040, %v1375, %v1465
        %v1467 = vsel %vm1042, %v1388, %v1466
        %v1468 = vsel %vm1044, %v1401, %v1467
        %v1469 = vsel %vm1046, %v1414, %v1468
        %v1470 = vsel %vm1048, %v1427, %v1469
        %v1471 = vsel %vm1050, %v1440, %v1470
        %1473 = vmatprep.subr.mxu0 0.0
        %1474 = vmatpush1.msra.mxu0 %v1441
        %1475 = vmatprep.subr.mxu0 0.0
        %1476 = vmatpush1.msra.mxu0 %v1442
        %1477 = vmatprep.subr.mxu0 0.0
        %1478 = vmatpush1.msra.mxu0 %v1443
        %1479 = vmatprep.subr.mxu0 0.0
        %1480 = vmatpush1.msra.mxu0 %v1444
        %1481 = vmatprep.subr.mxu0 0.0
        %1482 = vmatpush1.msra.mxu0 %v1445
        %1483 = vmatprep.subr.mxu0 0.0
        %1484 = vmatpush1.msra.mxu0 %v1446
        %1485 = vmatprep.subr.mxu0 0.0
        %1486 = vmatpush1.msra.mxu0 %v1447
        %1487 = vmatprep.subr.mxu0 0.0
        %1488 = vmatpush1.msra.mxu0 %v1448
        %1489 = vmatprep.subr.mxu0 0.0
        %1490 = vmatpush1.msra.mxu0 %v1449
        %1491 = vmatprep.subr.mxu0 0.0
        %1492 = vmatpush1.msra.mxu0 %v1450
        %1493 = vmatprep.subr.mxu0 0.0
        %1494 = vmatpush1.msra.mxu0 %v1451
        %1495 = vmatprep.subr.mxu0 0.0
        %1496 = vmatpush1.msra.mxu0 %v1452
        %1497 = vmatprep.subr.mxu0 0.0
        %1498 = vmatpush1.msra.mxu0 %v1453
        %1499 = vmatprep.subr.mxu0 0.0
        %1500 = vmatpush1.msra.mxu0 %v1454
        %1501 = vmatprep.subr.mxu0 0.0
        %1502 = vmatpush1.msra.mxu0 %v1455
        %1503 = vmatprep.subr.mxu0 0.0
        %1504 = vmatpush1.msra.mxu0 %v1456
        %1505 = vmatprep.subr.mxu0 0.0
        %1506 = vmatpush1.msra.mxu0 0.0
        %1507 = vmatprep.subr.mxu0 0.0
        %1508 = vmatpush1.msra.mxu0 0.0
        %1509 = vmatprep.subr.mxu0 0.0
        %1510 = vmatpush1.msra.mxu0 0.0
        %1511 = vmatprep.subr.mxu0 0.0
        %1512 = vmatpush1.msra.mxu0 0.0
        %1513 = vmatprep.subr.mxu0 0.0
        %1514 = vmatpush1.msra.mxu0 0.0
        %1515 = vmatprep.subr.mxu0 0.0
        %1516 = vmatpush1.msra.mxu0 0.0
        %1517 = vmatprep.subr.mxu0 0.0
        %1518 = vmatpush1.msra.mxu0 0.0
        %1519 = vmatprep.subr.mxu0 0.0
        %1520 = vmatpush1.msra.mxu0 0.0
        %1521 = vmatprep.subr.mxu0 0.0
        %1522 = vmatpush1.msra.mxu0 0.0
        %1523 = vmatprep.subr.mxu0 0.0
        %1524 = vmatpush1.msra.mxu0 0.0
        %1525 = vmatprep.subr.mxu0 0.0
        %1526 = vmatpush1.msra.mxu0 0.0
        %1527 = vmatprep.subr.mxu0 0.0
        %1528 = vmatpush1.msra.mxu0 0.0
        %1529 = vmatprep.subr.mxu0 0.0
        %1530 = vmatpush1.msra.mxu0 0.0
        %1531 = vmatprep.subr.mxu0 0.0
        %1532 = vmatpush1.msra.mxu0 0.0
        %1533 = vmatprep.subr.mxu0 0.0
        %1534 = vmatpush1.msra.mxu0 0.0
        %1535 = vmatprep.subr.mxu0 0.0
        %1536 = vmatpush1.msra.mxu0 0.0
        %1537 = vmatprep.mubr.f32.mxu0 0.0
        %1538 = vmatmul.mubr.f32.gmra.mrb[0].mxu0 %v1471
        %v1539 = vpop.f32.mrb[0].mxu0
        %v1540 = vadd.f32 0.0, %v1539
        %v1541 = vpop.f32.mrb[0].mxu0
        %1542 = vdwg.mxu0
        %v1543 = vadd.f32 %v1206, %v1540
        %v1544 = vld [vmem:[%s464] sm:$0xf]
        %v1545 = vld [vmem:[%s464 + $0x4] sm:$0xf]
        %v1546 = vld [vmem:[%s464 + $0x8] sm:$0xf]
        %v1547 = vld [vmem:[%s464 + $0xc] sm:$0xf]
        %v1548 = vld [vmem:[%s464 + $0x10] sm:$0xf]
        %v1549 = vld [vmem:[%s464 + $0x14] sm:$0xf]
        %v1550 = vld [vmem:[%s464 + $0x18] sm:$0xf]
        %v1551 = vld [vmem:[%s464 + $0x1c] sm:$0xf]
        %v1552 = vld [vmem:[%s464 + $0x20] sm:$0xf]
        %v1553 = vld [vmem:[%s464 + $0x24] sm:$0xf]
        %v1554 = vld [vmem:[%s464 + $0x28] sm:$0xf]
        %v1555 = vld [vmem:[%s464 + $0x2c] sm:$0xf]
        %v1556 = vld [vmem:[%s464 + $0x30] sm:$0xf]
        %v1557 = vld [vmem:[%s464 + $0x34] sm:$0xf]
        %v1558 = vld [vmem:[%s464 + $0x38] sm:$0xf]
        %v1559 = vld [vmem:[%s464 + $0x3c] sm:$0xf]
        %v1560 = vld [vmem:[%s464 + $0x40] sm:$0xf]
        %v1561 = vld [vmem:[%s464 + $0x44] sm:$0xf]
        %v1562 = vld [vmem:[%s464 + $0x48] sm:$0xf]
        %v1563 = vld [vmem:[%s464 + $0x4c] sm:$0xf]
        %v1564 = vld [vmem:[%s464 + $0x50] sm:$0xf]
        %v1565 = vld [vmem:[%s464 + $0x54] sm:$0xf]
        %v1566 = vld [vmem:[%s464 + $0x58] sm:$0xf]
        %v1567 = vld [vmem:[%s464 + $0x5c] sm:$0xf]
        %v1568 = vld [vmem:[%s464 + $0x60] sm:$0xf]
        %v1569 = vld [vmem:[%s464 + $0x64] sm:$0xf]
        %v1570 = vld [vmem:[%s464 + $0x68] sm:$0xf]
        %v1571 = vld [vmem:[%s464 + $0x6c] sm:$0xf]
        %v1572 = vld [vmem:[%s464 + $0x70] sm:$0xf]
        %v1573 = vld [vmem:[%s464 + $0x74] sm:$0xf]
        %v1574 = vld [vmem:[%s464 + $0x78] sm:$0xf]
        %v1575 = vld [vmem:[%s464 + $0x7c] sm:$0xf]
        %v1576 = vld [vmem:[%s464 + $0x80] sm:$0xf]
        %v1577 = vld [vmem:[%s464 + $0x84] sm:$0xf]
        %v1578 = vld [vmem:[%s464 + $0x88] sm:$0xf]
        %v1579 = vld [vmem:[%s464 + $0x8c] sm:$0xf]
        %v1580 = vld [vmem:[%s464 + $0x90] sm:$0xf]
        %v1581 = vld [vmem:[%s464 + $0x94] sm:$0xf]
        %v1582 = vld [vmem:[%s464 + $0x98] sm:$0xf]
        %v1583 = vld [vmem:[%s464 + $0x9c] sm:$0xf]
        %v1584 = vld [vmem:[%s464 + $0xa0] sm:$0xf]
        %v1585 = vld [vmem:[%s464 + $0xa4] sm:$0xf]
        %v1586 = vld [vmem:[%s464 + $0xa8] sm:$0xf]
        %v1587 = vld [vmem:[%s464 + $0xac] sm:$0xf]
        %v1588 = vld [vmem:[%s464 + $0xb0] sm:$0xf]
        %v1589 = vld [vmem:[%s464 + $0xb4] sm:$0xf]
        %v1590 = vld [vmem:[%s464 + $0xb8] sm:$0xf]
        %v1591 = vld [vmem:[%s464 + $0xbc] sm:$0xf]
        %v1592 = vld [vmem:[%s464 + $0xc0] sm:$0xf]
        %v1593 = vld [vmem:[%s464 + $0xc4] sm:$0xf]
        %v1594 = vld [vmem:[%s464 + $0xc8] sm:$0xf]
        %v1595 = vld [vmem:[%s464 + $0xcc] sm:$0xf]
        %v1596 = vld [vmem:[%s464 + $0xd0] sm:$0xf]
        %v1597 = vld [vmem:[%s464 + $0xd4] sm:$0xf]
        %v1598 = vld [vmem:[%s464 + $0xd8] sm:$0xf]
        %v1599 = vld [vmem:[%s464 + $0xdc] sm:$0xf]
        %v1600 = vld [vmem:[%s464 + $0xe0] sm:$0xf]
        %v1601 = vld [vmem:[%s464 + $0xe4] sm:$0xf]
        %v1602 = vld [vmem:[%s464 + $0xe8] sm:$0xf]
        %v1603 = vld [vmem:[%s464 + $0xec] sm:$0xf]
        %v1604 = vld [vmem:[%s464 + $0xf0] sm:$0xf]
        %v1605 = vld [vmem:[%s464 + $0xf4] sm:$0xf]
        %v1606 = vld [vmem:[%s464 + $0xf8] sm:$0xf]
        %v1607 = vld [vmem:[%s464 + $0xfc] sm:$0xf]
        %v1608 = vunpack.c.l.bf16 %v1544
        %v1609 = vunpack.c.l.bf16 %v1545
        %v1610 = vunpack.c.l.bf16 %v1546
        %v1611 = vunpack.c.l.bf16 %v1547
        %v1612 = vunpack.c.l.bf16 %v1548
        %v1613 = vunpack.c.l.bf16 %v1549
        %v1614 = vunpack.c.l.bf16 %v1550
        %v1615 = vunpack.c.l.bf16 %v1551
        %v1616 = vunpack.c.l.bf16 %v1552
        %v1617 = vunpack.c.l.bf16 %v1553
        %v1618 = vunpack.c.l.bf16 %v1554
        %v1619 = vunpack.c.l.bf16 %v1555
        %v1620 = vunpack.c.l.bf16 %v1556
        %v1621 = vunpack.c.l.bf16 %v1557
        %v1622 = vunpack.c.l.bf16 %v1558
        %v1623 = vunpack.c.l.bf16 %v1559
        %v1624 = vunpack.c.l.bf16 %v1560
        %v1625 = vunpack.c.l.bf16 %v1561
        %v1626 = vunpack.c.l.bf16 %v1562
        %v1627 = vunpack.c.l.bf16 %v1563
        %v1628 = vunpack.c.l.bf16 %v1564
        %v1629 = vunpack.c.l.bf16 %v1565
        %v1630 = vunpack.c.l.bf16 %v1566
        %v1631 = vunpack.c.l.bf16 %v1567
        %v1632 = vunpack.c.l.bf16 %v1568
        %v1633 = vunpack.c.l.bf16 %v1569
        %v1634 = vunpack.c.l.bf16 %v1570
        %v1635 = vunpack.c.l.bf16 %v1571
        %v1636 = vunpack.c.l.bf16 %v1572
        %v1637 = vunpack.c.l.bf16 %v1573
        %v1638 = vunpack.c.l.bf16 %v1574
        %v1639 = vunpack.c.l.bf16 %v1575
        %v1640 = vunpack.c.l.bf16 %v1576
        %v1641 = vunpack.c.l.bf16 %v1577
        %v1642 = vunpack.c.l.bf16 %v1578
        %v1643 = vunpack.c.l.bf16 %v1579
        %v1644 = vunpack.c.l.bf16 %v1580
        %v1645 = vunpack.c.l.bf16 %v1581
        %v1646 = vunpack.c.l.bf16 %v1582
        %v1647 = vunpack.c.l.bf16 %v1583
        %v1648 = vunpack.c.l.bf16 %v1584
        %v1649 = vunpack.c.l.bf16 %v1585
        %v1650 = vunpack.c.l.bf16 %v1586
        %v1651 = vunpack.c.l.bf16 %v1587
        %v1652 = vunpack.c.l.bf16 %v1588
        %v1653 = vunpack.c.l.bf16 %v1589
        %v1654 = vunpack.c.l.bf16 %v1590
        %v1655 = vunpack.c.l.bf16 %v1591
        %v1656 = vunpack.c.l.bf16 %v1592
        %v1657 = vunpack.c.l.bf16 %v1593
        %v1658 = vunpack.c.l.bf16 %v1594
        %v1659 = vunpack.c.l.bf16 %v1595
        %v1660 = vunpack.c.l.bf16 %v1596
        %v1661 = vunpack.c.l.bf16 %v1597
        %v1662 = vunpack.c.l.bf16 %v1598
        %v1663 = vunpack.c.l.bf16 %v1599
        %v1664 = vunpack.c.l.bf16 %v1600
        %v1665 = vunpack.c.l.bf16 %v1601
        %v1666 = vunpack.c.l.bf16 %v1602
        %v1667 = vunpack.c.l.bf16 %v1603
        %v1668 = vunpack.c.l.bf16 %v1604
        %v1669 = vunpack.c.l.bf16 %v1605
        %v1670 = vunpack.c.l.bf16 %v1606
        %v1671 = vunpack.c.l.bf16 %v1607
        %v1672 = vadd.f32 %v1608, %v1609
        %v1673 = vadd.f32 %v1672, %v1610
        %v1674 = vadd.f32 %v1673, %v1611
        %v1675 = vadd.f32 %v1674, %v1612
        %v1676 = vadd.f32 %v1675, %v1613
        %v1677 = vadd.f32 %v1676, %v1614
        %v1678 = vadd.f32 %v1677, %v1615
        %v1679 = vrot.slane %v1678, 4
        %v1680 = vadd.f32 %v1678, %v1679
        %v1681 = vrot.slane %v1680, 2
        %v1682 = vadd.f32 %v1680, %v1681
        %v1683 = vrot.slane %v1682, 1
        %v1684 = vadd.f32 %v1682, %v1683
        %v1685 = vadd.f32 %v1616, %v1617
        %v1686 = vadd.f32 %v1685, %v1618
        %v1687 = vadd.f32 %v1686, %v1619
        %v1688 = vadd.f32 %v1687, %v1620
        %v1689 = vadd.f32 %v1688, %v1621
        %v1690 = vadd.f32 %v1689, %v1622
        %v1691 = vadd.f32 %v1690, %v1623
        %v1692 = vrot.slane %v1691, 4
        %v1693 = vadd.f32 %v1691, %v1692
        %v1694 = vrot.slane %v1693, 2
        %v1695 = vadd.f32 %v1693, %v1694
        %v1696 = vrot.slane %v1695, 1
        %v1697 = vadd.f32 %v1695, %v1696
        %v1698 = vadd.f32 %v1624, %v1625
        %v1699 = vadd.f32 %v1698, %v1626
        %v1700 = vadd.f32 %v1699, %v1627
        %v1701 = vadd.f32 %v1700, %v1628
        %v1702 = vadd.f32 %v1701, %v1629
        %v1703 = vadd.f32 %v1702, %v1630
        %v1704 = vadd.f32 %v1703, %v1631
        %v1705 = vrot.slane %v1704, 4
        %v1706 = vadd.f32 %v1704, %v1705
        %v1707 = vrot.slane %v1706, 2
        %v1708 = vadd.f32 %v1706, %v1707
        %v1709 = vrot.slane %v1708, 1
        %v1710 = vadd.f32 %v1708, %v1709
        %v1711 = vadd.f32 %v1632, %v1633
        %v1712 = vadd.f32 %v1711, %v1634
        %v1713 = vadd.f32 %v1712, %v1635
        %v1714 = vadd.f32 %v1713, %v1636
        %v1715 = vadd.f32 %v1714, %v1637
        %v1716 = vadd.f32 %v1715, %v1638
        %v1717 = vadd.f32 %v1716, %v1639
        %v1718 = vrot.slane %v1717, 4
        %v1719 = vadd.f32 %v1717, %v1718
        %v1720 = vrot.slane %v1719, 2
        %v1721 = vadd.f32 %v1719, %v1720
        %v1722 = vrot.slane %v1721, 1
        %v1723 = vadd.f32 %v1721, %v1722
        %v1724 = vadd.f32 %v1640, %v1641
        %v1725 = vadd.f32 %v1724, %v1642
        %v1726 = vadd.f32 %v1725, %v1643
        %v1727 = vadd.f32 %v1726, %v1644
        %v1728 = vadd.f32 %v1727, %v1645
        %v1729 = vadd.f32 %v1728, %v1646
        %v1730 = vadd.f32 %v1729, %v1647
        %v1731 = vrot.slane %v1730, 4
        %v1732 = vadd.f32 %v1730, %v1731
        %v1733 = vrot.slane %v1732, 2
        %v1734 = vadd.f32 %v1732, %v1733
        %v1735 = vrot.slane %v1734, 1
        %v1736 = vadd.f32 %v1734, %v1735
        %v1737 = vadd.f32 %v1648, %v1649
        %v1738 = vadd.f32 %v1737, %v1650
        %v1739 = vadd.f32 %v1738, %v1651
        %v1740 = vadd.f32 %v1739, %v1652
        %v1741 = vadd.f32 %v1740, %v1653
        %v1742 = vadd.f32 %v1741, %v1654
        %v1743 = vadd.f32 %v1742, %v1655
        %v1744 = vrot.slane %v1743, 4
        %v1745 = vadd.f32 %v1743, %v1744
        %v1746 = vrot.slane %v1745, 2
        %v1747 = vadd.f32 %v1745, %v1746
        %v1748 = vrot.slane %v1747, 1
        %v1749 = vadd.f32 %v1747, %v1748
        %v1750 = vadd.f32 %v1656, %v1657
        %v1751 = vadd.f32 %v1750, %v1658
        %v1752 = vadd.f32 %v1751, %v1659
        %v1753 = vadd.f32 %v1752, %v1660
        %v1754 = vadd.f32 %v1753, %v1661
        %v1755 = vadd.f32 %v1754, %v1662
        %v1756 = vadd.f32 %v1755, %v1663
        %v1757 = vrot.slane %v1756, 4
        %v1758 = vadd.f32 %v1756, %v1757
        %v1759 = vrot.slane %v1758, 2
        %v1760 = vadd.f32 %v1758, %v1759
        %v1761 = vrot.slane %v1760, 1
        %v1762 = vadd.f32 %v1760, %v1761
        %v1763 = vadd.f32 %v1664, %v1665
        %v1764 = vadd.f32 %v1763, %v1666
        %v1765 = vadd.f32 %v1764, %v1667
        %v1766 = vadd.f32 %v1765, %v1668
        %v1767 = vadd.f32 %v1766, %v1669
        %v1768 = vadd.f32 %v1767, %v1670
        %v1769 = vadd.f32 %v1768, %v1671
        %v1770 = vrot.slane %v1769, 4
        %v1771 = vadd.f32 %v1769, %v1770
        %v1772 = vrot.slane %v1771, 2
        %v1773 = vadd.f32 %v1771, %v1772
        %v1774 = vrot.slane %v1773, 1
        %v1775 = vadd.f32 %v1773, %v1774
        %v1776 = vld [vmem:[#allocation14] sm:$0xff]
        %v1777 = vld [vmem:[#allocation14 + $0x8] sm:$0xff]
        %v1778 = vld [vmem:[#allocation14 + $0x10] sm:$0xff]
        %v1779 = vld [vmem:[#allocation14 + $0x18] sm:$0xff]
        %v1780 = vld [vmem:[#allocation14 + $0x20] sm:$0xff]
        %v1781 = vld [vmem:[#allocation14 + $0x28] sm:$0xff]
        %v1782 = vld [vmem:[#allocation14 + $0x30] sm:$0xff]
        %v1783 = vld [vmem:[#allocation14 + $0x38] sm:$0xff]
        %v1784 = vld [vmem:[#allocation14 + $0x40] sm:$0xff]
        %v1785 = vld [vmem:[#allocation14 + $0x48] sm:$0xff]
        %v1786 = vld [vmem:[#allocation14 + $0x50] sm:$0xff]
        %v1787 = vld [vmem:[#allocation14 + $0x58] sm:$0xff]
        %v1788 = vld [vmem:[#allocation14 + $0x60] sm:$0xff]
        %v1789 = vld [vmem:[#allocation14 + $0x68] sm:$0xff]
        %v1790 = vld [vmem:[#allocation14 + $0x70] sm:$0xff]
        %v1791 = vld [vmem:[#allocation14 + $0x78] sm:$0xff]
        %v1800 = vsel %vm1038, %v1697, %v1684
        %v1801 = vsel %vm1040, %v1710, %v1800
        %v1802 = vsel %vm1042, %v1723, %v1801
        %v1803 = vsel %vm1044, %v1736, %v1802
        %v1804 = vsel %vm1046, %v1749, %v1803
        %v1805 = vsel %vm1048, %v1762, %v1804
        %v1806 = vsel %vm1050, %v1775, %v1805
        %1808 = vmatprep.subr.mxu0 0.0
        %1809 = vmatpush1.msra.mxu0 %v1776
        %1810 = vmatprep.subr.mxu0 0.0
        %1811 = vmatpush1.msra.mxu0 %v1777
        %1812 = vmatprep.subr.mxu0 0.0
        %1813 = vmatpush1.msra.mxu0 %v1778
        %1814 = vmatprep.subr.mxu0 0.0
        %1815 = vmatpush1.msra.mxu0 %v1779
        %1816 = vmatprep.subr.mxu0 0.0
        %1817 = vmatpush1.msra.mxu0 %v1780
        %1818 = vmatprep.subr.mxu0 0.0
        %1819 = vmatpush1.msra.mxu0 %v1781
        %1820 = vmatprep.subr.mxu0 0.0
        %1821 = vmatpush1.msra.mxu0 %v1782
        %1822 = vmatprep.subr.mxu0 0.0
        %1823 = vmatpush1.msra.mxu0 %v1783
        %1824 = vmatprep.subr.mxu0 0.0
        %1825 = vmatpush1.msra.mxu0 %v1784
        %1826 = vmatprep.subr.mxu0 0.0
        %1827 = vmatpush1.msra.mxu0 %v1785
        %1828 = vmatprep.subr.mxu0 0.0
        %1829 = vmatpush1.msra.mxu0 %v1786
        %1830 = vmatprep.subr.mxu0 0.0
        %1831 = vmatpush1.msra.mxu0 %v1787
        %1832 = vmatprep.subr.mxu0 0.0
        %1833 = vmatpush1.msra.mxu0 %v1788
        %1834 = vmatprep.subr.mxu0 0.0
        %1835 = vmatpush1.msra.mxu0 %v1789
        %1836 = vmatprep.subr.mxu0 0.0
        %1837 = vmatpush1.msra.mxu0 %v1790
        %1838 = vmatprep.subr.mxu0 0.0
        %1839 = vmatpush1.msra.mxu0 %v1791
        %1840 = vmatprep.subr.mxu0 0.0
        %1841 = vmatpush1.msra.mxu0 0.0
        %1842 = vmatprep.subr.mxu0 0.0
        %1843 = vmatpush1.msra.mxu0 0.0
        %1844 = vmatprep.subr.mxu0 0.0
        %1845 = vmatpush1.msra.mxu0 0.0
        %1846 = vmatprep.subr.mxu0 0.0
        %1847 = vmatpush1.msra.mxu0 0.0
        %1848 = vmatprep.subr.mxu0 0.0
        %1849 = vmatpush1.msra.mxu0 0.0
        %1850 = vmatprep.subr.mxu0 0.0
        %1851 = vmatpush1.msra.mxu0 0.0
        %1852 = vmatprep.subr.mxu0 0.0
        %1853 = vmatpush1.msra.mxu0 0.0
        %1854 = vmatprep.subr.mxu0 0.0
        %1855 = vmatpush1.msra.mxu0 0.0
        %1856 = vmatprep.subr.mxu0 0.0
        %1857 = vmatpush1.msra.mxu0 0.0
        %1858 = vmatprep.subr.mxu0 0.0
        %1859 = vmatpush1.msra.mxu0 0.0
        %1860 = vmatprep.subr.mxu0 0.0
        %1861 = vmatpush1.msra.mxu0 0.0
        %1862 = vmatprep.subr.mxu0 0.0
        %1863 = vmatpush1.msra.mxu0 0.0
        %1864 = vmatprep.subr.mxu0 0.0
        %1865 = vmatpush1.msra.mxu0 0.0
        %1866 = vmatprep.subr.mxu0 0.0
        %1867 = vmatpush1.msra.mxu0 0.0
        %1868 = vmatprep.subr.mxu0 0.0
        %1869 = vmatpush1.msra.mxu0 0.0
        %1870 = vmatprep.subr.mxu0 0.0
        %1871 = vmatpush1.msra.mxu0 0.0
        %1872 = vmatprep.mubr.f32.mxu0 0.0
        %1873 = vmatmul.mubr.f32.gmra.mrb[0].mxu0 %v1806
        %v1874 = vpop.f32.mrb[0].mxu0
        %v1875 = vadd.f32 0.0, %v1874
        %v1876 = vpop.f32.mrb[0].mxu0
        %1877 = vdwg.mxu0
        %v1878 = vadd.f32 %v1543, %v1875
        %v1879 = vld [vmem:[%s8] sm:$0x1]
        %v1881 = vlaneseq
        %v1882 = vshrl.u32 %v1881, 7
        %v1883 = vsub.s32 0, %v1882
        %v1884 = vrot.slane %v1879, %v1883
        %v1886 = vadd.f32 %v1878, %v1884
        %1887 = vst [vmem:[%s529] sm:$0xff] %v1886
        %s1888 = sand.u32 %s251, 1
        %s1889 = scalar_lea.sflag [#allocation4], %s1888
        %s1890 = sand.u32 %s251, 1
        %s1891 = smul.addr %s1890, 8
        %s1892 = scalar_lea.vmem [#allocation16], %s1891
        // Predicated region
        $region89: #{tpu_custom_call.1} parent=55 // pred_check
          %p1893 = pneg %p261
        $region90: #{tpu_custom_call.1} parent=55 // pred_check_branch
          %1895 = sbr.rel (%p1893) target = $region92
        $region91: #{tpu_custom_call.1} parent=55 // pred_region
          %s1897 = ssub.s32 128, 128
          %1898 = vsyncadd %s1889, %s1897
          %s1899 = smul.addr %s34, 128
          %s1900 = scalar_lea.hbm %s9, %s1899
          %s1902 = sshll.u32 %s1892, 4
          %s1903 = int_to_ptr.vmem [resolvable:$true] %s1902
          %1905 = dma.vmem_to_hbm [thread:$0]  %s1903, 128, %s1900, %s1889
        $region92: #{tpu_custom_call.1} parent=55 // pred_fallthru
          _
      $region56: #{tpu_custom_call.1} parent=5 // pred_fallthru
        _
      %p1906 = scmp.le.s32.totalorder 2, %s29
      // Predicated region
      $region93: #{tpu_custom_call.1} parent=5 // pred_check
        %p1907 = pneg %p1906
      $region94: #{tpu_custom_call.1} parent=5 // pred_check_branch
        %1909 = sbr.rel (%p1907) target = $region96
      $region95: #{tpu_custom_call.1} parent=5 // pred_region
        %s1910 = ssub.s32 %s29, 2
        // Predicated region
        $region97: #{tpu_custom_call.1} parent=95 // pred_check
          %p1911 = pneg %p267
        $region98: #{tpu_custom_call.1} parent=95 // pred_check_branch
          %1913 = sbr.rel (%p1911) target = $region100
        $region99: #{tpu_custom_call.1} parent=95 // pred_region
          %s1914 = sand.u32 %s252, 1
          %s1915 = scalar_lea.sflag [#allocation4], %s1914
          %s1916 = sand.u32 %s252, 1
          %s1917 = smul.addr %s1916, 8
          %s1918 = scalar_lea.vmem [#allocation16], %s1917
          %1919 = dma.done %s1915, 128
        $region100: #{tpu_custom_call.1} parent=95 // pred_fallthru
          _
      $region96: #{tpu_custom_call.1} parent=5 // pred_fallthru
        _
    $region6: #{tpu_custom_call.1} parent=1 // loop_footer
      %s33 = sadd.s32 1, %s29
    $region7: #{tpu_custom_call.1} parent=1 // loop_footer_branch
      %28 = sbr.rel target = $region3
    $region8: #{tpu_custom_call.1} parent=1 // loop_exit
      _
    %1920 = vsyncpa [#allocation3], 1
    %s1921 = scalar_lea.sflag [#allocation3], 1
    %1922 = vsyncpa %s1921, 1
    %1923 = vsyncpa [#allocation6], 1
    %s1924 = scalar_lea.sflag [#allocation6], 1
    %1925 = vsyncpa %s1924, 1
    %1926 = vsyncpa [#allocation9], 1
    %s1927 = scalar_lea.sflag [#allocation9], 1
    %1928 = vsyncpa %s1927, 1
    %1929 = vsyncpa [#allocation12], 1
    %1930 = vsyncpa [#allocation15], 1
    %1931 = vsyncpa [#allocation4], 1
    %s1932 = scalar_lea.sflag [#allocation4], 1
    %1933 = vsyncpa %s1932, 1

</llo_original>
